<compile_context>
chip_gen: v6e
topology: v6e:2x2x1
jax: 0.10.0
libtpu: 0.0.40
codegen_flags: <defaults>
</compile_context>

<pallas_src>
import functools

import jax
import jax.numpy as jnp
from jax.experimental import pallas as pl
from jax.experimental.pallas import tpu as pltpu

# Logical layer sizes of PlaneNet.
D_IN = 2
H1, H2, D_OUT = 500, 100, 20
# Lane-padded sizes (multiples of 128).
H1_P, H2_P, D_OUT_P = 512, 128, 128


def _round_up(x, m):
    return (x + m - 1) // m * m


def _plane_net_kernel(x_ref, w1_ref, b1_ref, w2_ref, b2_ref, w3_ref, b3_ref,
                      o_ref):
    # fc1: K=2 contraction done on the VPU as two broadcast multiply-adds.
    x = x_ref[...]                                   # (TM, 2)
    w1 = w1_ref[...]                                 # (2, 512)
    h1 = (x[:, 0:1] * w1[0:1, :]
          + x[:, 1:2] * w1[1:2, :]
          + b1_ref[...])
    h1 = jnp.maximum(h1, 0.0)                        # (TM, 512)

    # fc2: (TM, 512) @ (512, 128) on the MXU, f32 accumulate.
    h2 = jnp.dot(h1, w2_ref[...],
                 preferred_element_type=jnp.float32) + b2_ref[...]
    h2 = jnp.maximum(h2, 0.0)                        # (TM, 128)

    # fc3: (TM, 128) @ (128, 128); lane-dense 128-wide output store.
    o_ref[...] = (jnp.dot(h2, w3_ref[...],
                          preferred_element_type=jnp.float32)
                  + b3_ref[...]).astype(o_ref.dtype)


def _pad_params(params):
    """Zero-pad weights/biases to lane-aligned feature sizes."""
    w1 = jnp.pad(params["w1"], ((0, 0), (0, H1_P - H1)))
    b1 = jnp.pad(params["b1"], ((0, 0), (0, H1_P - H1)))
    w2 = jnp.pad(params["w2"], ((0, H1_P - H1), (0, H2_P - H2)))
    b2 = jnp.pad(params["b2"], ((0, 0), (0, H2_P - H2)))
    w3 = jnp.pad(params["w3"], ((0, H2_P - H2), (0, D_OUT_P - D_OUT)))
    b3 = jnp.pad(params["b3"], ((0, 0), (0, D_OUT_P - D_OUT)))
    return w1, b1, w2, b2, w3, b3


@functools.partial(jax.jit, static_argnames=("tile_m",))
def plane_net_forward(x, params, *, tile_m=1024):
    """x: (N, 2) float32.  params: dict of w1,b1,w2,b2,w3,b3 (logical shapes)."""
    N, d_in = x.shape
    assert d_in == D_IN

    # Clamp the batch tile to the (sublane-aligned) batch size so tiny batches
    # don't over-pad; keep it a multiple of 8 (f32 sublane).
    tile_m = max(8, min(tile_m, _round_up(N, 8)))
    tile_m = _round_up(tile_m, 8)
    assert tile_m % 8 == 0

    # Pad the batch so the grid divides evenly; padded rows are sliced off.
    n_pad = _round_up(N, tile_m)
    if n_pad != N:
        x = jnp.pad(x, ((0, n_pad - N), (0, 0)))

    w1, b1, w2, b2, w3, b3 = _pad_params(params)

    grid = (n_pad // tile_m,)
    full = lambda shape: pl.BlockSpec(shape, lambda i: (0, 0))

    flops = 2 * N * (D_IN * H1 + H1 * H2 + H2 * D_OUT)
    bytes_accessed = 4 * (N * (D_IN + D_OUT)
                          + D_IN * H1 + H1
                          + H1 * H2 + H2
                          + H2 * D_OUT + D_OUT)

    out = pl.pallas_call(
        _plane_net_kernel,
        out_shape=jax.ShapeDtypeStruct((n_pad, D_OUT_P), jnp.float32),
        grid_spec=pltpu.PrefetchScalarGridSpec(
            num_scalar_prefetch=0,
            grid=grid,
            in_specs=[
                pl.BlockSpec((tile_m, D_IN), lambda i: (i, 0)),      # x tile
                full(w1.shape), full(b1.shape),
                full(w2.shape), full(b2.shape),
                full(w3.shape), full(b3.shape),
            ],
            out_specs=pl.BlockSpec((tile_m, D_OUT_P), lambda i: (i, 0)),
        ),
        compiler_params=pltpu.CompilerParams(
            dimension_semantics=("parallel",)),
        cost_estimate=pl.CostEstimate(
            flops=flops, transcendentals=0, bytes_accessed=bytes_accessed),
    )(x, w1, b1, w2, b2, w3, b3)

    # Drop batch padding and lane padding of the output.
    return out[:N, :D_OUT]


def init_params(key):
    """Deterministic init mirroring nn.Linear shapes (weights transposed)."""
    sizes = [(D_IN, H1), (H1, H2), (H2, D_OUT)]
    params = {}
    for idx, (fan_in, fan_out) in enumerate(sizes, start=1):
        key, kw, kb = jax.random.split(key, 3)
        bound = 1.0 / jnp.sqrt(fan_in)  # PyTorch default U(-1/sqrt(in), 1/sqrt(in))
        params[f"w{idx}"] = jax.random.uniform(
            kw, (fan_in, fan_out), jnp.float32, -bound, bound)
        params[f"b{idx}"] = jax.random.uniform(
            kb, (1, fan_out), jnp.float32, -bound, bound)
    return params


def reference_forward(x, params):
    h1 = jnp.maximum(x @ params["w1"] + params["b1"], 0.0)
    h2 = jnp.maximum(h1 @ params["w2"] + params["b2"], 0.0)
    return h2 @ params["w3"] + params["b3"]


if __name__ == "__main__":
    key = jax.random.PRNGKey(0)
    key, kx = jax.random.split(key)
    params = init_params(key)

    N = 300  # small, ragged batch (exercises wrapper-side padding)
    x = jax.random.normal(kx, (N, 2), jnp.float32)

    out = plane_net_forward(x, params)
    out = jax.block_until_ready(out)

    ref = reference_forward(x, params)
    assert out.shape == (N, D_OUT)
    assert jnp.allclose(out, ref, atol=1e-4, rtol=1e-4)
    print("KERNEL_OK")
</pallas_src>

<mosaic_0001>
module attributes {stable_mosaic.version = 11 : i64} {
  func.func @_plane_net_kernel(%arg0: i32, %arg1: memref<304x2xf32, #tpu.memory_space<vmem>>, %arg2: memref<2x512xf32, #tpu.memory_space<vmem>>, %arg3: memref<1x512xf32, #tpu.memory_space<vmem>>, %arg4: memref<512x128xf32, #tpu.memory_space<vmem>>, %arg5: memref<1x128xf32, #tpu.memory_space<vmem>>, %arg6: memref<128x128xf32, #tpu.memory_space<vmem>>, %arg7: memref<1x128xf32, #tpu.memory_space<vmem>>, %arg8: memref<304x128xf32, #tpu.memory_space<vmem>>) attributes {dimension_semantics = [#tpu.dimension_semantics<parallel>], iteration_bounds = array<i64: 1>, scalar_prefetch = 0 : i64, scratch_operands = 0 : i64, tpu.core_type = #tpu.core_type<tc>, window_params = [{transform_indices = @transform_0, window_bounds = array<i64: 304, 2>}, {pipeline_mode = #tpu.pipeline_mode<synchronous>, transform_indices = @transform_1, window_bounds = array<i64: 2, 512>}, {pipeline_mode = #tpu.pipeline_mode<synchronous>, transform_indices = @transform_2, window_bounds = array<i64: 1, 512>}, {pipeline_mode = #tpu.pipeline_mode<synchronous>, transform_indices = @transform_3, window_bounds = array<i64: 512, 128>}, {pipeline_mode = #tpu.pipeline_mode<synchronous>, transform_indices = @transform_4, window_bounds = array<i64: 1, 128>}, {pipeline_mode = #tpu.pipeline_mode<synchronous>, transform_indices = @transform_5, window_bounds = array<i64: 128, 128>}, {pipeline_mode = #tpu.pipeline_mode<synchronous>, transform_indices = @transform_6, window_bounds = array<i64: 1, 128>}, {transform_indices = @transform_7, window_bounds = array<i64: 304, 128>}]} {
    %c0 = arith.constant 0 : index
    %c0_0 = arith.constant 0 : index
    %0 = vector.load %arg1[%c0, %c0_0] : memref<304x2xf32, #tpu.memory_space<vmem>>, vector<304x2xf32>
    %c0_1 = arith.constant 0 : index
    %c0_2 = arith.constant 0 : index
    %1 = vector.load %arg2[%c0_1, %c0_2] : memref<2x512xf32, #tpu.memory_space<vmem>>, vector<2x512xf32>
    %2 = vector.extract_strided_slice %0 {offsets = [0, 0], sizes = [304, 1], strides = [1, 1]} : vector<304x2xf32> to vector<304x1xf32>
    %3 = vector.extract_strided_slice %1 {offsets = [0, 0], sizes = [1, 512], strides = [1, 1]} : vector<2x512xf32> to vector<1x512xf32>
    %4 = vector.broadcast %2 : vector<304x1xf32> to vector<304x512xf32>
    %5 = vector.broadcast %3 : vector<1x512xf32> to vector<304x512xf32>
    %6 = arith.mulf %4, %5 : vector<304x512xf32>
    %7 = vector.extract_strided_slice %0 {offsets = [0, 1], sizes = [304, 1], strides = [1, 1]} : vector<304x2xf32> to vector<304x1xf32>
    %8 = vector.extract_strided_slice %1 {offsets = [1, 0], sizes = [1, 512], strides = [1, 1]} : vector<2x512xf32> to vector<1x512xf32>
    %9 = vector.broadcast %7 : vector<304x1xf32> to vector<304x512xf32>
    %10 = vector.broadcast %8 : vector<1x512xf32> to vector<304x512xf32>
    %11 = arith.mulf %9, %10 : vector<304x512xf32>
    %12 = arith.addf %6, %11 : vector<304x512xf32>
    %c0_3 = arith.constant 0 : index
    %c0_4 = arith.constant 0 : index
    %13 = vector.load %arg3[%c0_3, %c0_4] : memref<1x512xf32, #tpu.memory_space<vmem>>, vector<1x512xf32>
    %14 = vector.broadcast %13 : vector<1x512xf32> to vector<304x512xf32>
    %15 = arith.addf %12, %14 : vector<304x512xf32>
    %cst = arith.constant 0.000000e+00 : f32
    %16 = vector.broadcast %cst : f32 to vector<304x512xf32>
    %17 = arith.maximumf %15, %16 : vector<304x512xf32>
    %c0_5 = arith.constant 0 : index
    %c0_6 = arith.constant 0 : index
    %18 = vector.load %arg4[%c0_5, %c0_6] : memref<512x128xf32, #tpu.memory_space<vmem>>, vector<512x128xf32>
    %cst_7 = arith.constant dense<0.000000e+00> : vector<304x128xf32>
    %19 = tpu.matmul %17, %18, %cst_7 {dimension_numbers = #tpu.dot_dimension_numbers<[1], [0], [0], [1], [0, 0, 1, 1], [], []>} : vector<304x512xf32>, vector<512x128xf32>, vector<304x128xf32> -> vector<304x128xf32>
    %c0_8 = arith.constant 0 : index
    %c0_9 = arith.constant 0 : index
    %20 = vector.load %arg5[%c0_8, %c0_9] : memref<1x128xf32, #tpu.memory_space<vmem>>, vector<1x128xf32>
    %21 = vector.broadcast %20 : vector<1x128xf32> to vector<304x128xf32>
    %22 = arith.addf %19, %21 : vector<304x128xf32>
    %cst_10 = arith.constant 0.000000e+00 : f32
    %23 = vector.broadcast %cst_10 : f32 to vector<304x128xf32>
    %24 = arith.maximumf %22, %23 : vector<304x128xf32>
    %c0_11 = arith.constant 0 : index
    %c0_12 = arith.constant 0 : index
    %25 = vector.load %arg6[%c0_11, %c0_12] : memref<128x128xf32, #tpu.memory_space<vmem>>, vector<128x128xf32>
    %cst_13 = arith.constant dense<0.000000e+00> : vector<304x128xf32>
    %26 = tpu.matmul %24, %25, %cst_13 {dimension_numbers = #tpu.dot_dimension_numbers<[1], [0], [0], [1], [0, 0, 1, 1], [], []>} : vector<304x128xf32>, vector<128x128xf32>, vector<304x128xf32> -> vector<304x128xf32>
    %c0_14 = arith.constant 0 : index
    %c0_15 = arith.constant 0 : index
    %27 = vector.load %arg7[%c0_14, %c0_15] : memref<1x128xf32, #tpu.memory_space<vmem>>, vector<1x128xf32>
    %28 = vector.broadcast %27 : vector<1x128xf32> to vector<304x128xf32>
    %29 = arith.addf %26, %28 : vector<304x128xf32>
    %c0_16 = arith.constant 0 : index
    %c0_17 = arith.constant 0 : index
    %30 = vector.load %arg8[%c0_16, %c0_17] : memref<304x128xf32, #tpu.memory_space<vmem>>, vector<304x128xf32>
    tpu.vector_store %arg8[%c0_16, %c0_17], %29 {strides = array<i32>} : memref<304x128xf32, #tpu.memory_space<vmem>>, vector<304x128xf32>,
    return
  }
  func.func @transform_0(%arg0: i32) -> (i32, i32) {
    %c0_i32 = arith.constant 0 : i32
    %c0_i32_0 = arith.constant 0 : i32
    return %arg0, %c0_i32 : i32, i32
  }
  func.func @transform_1(%arg0: i32) -> (i32, i32) {
    %c0_i32 = arith.constant 0 : i32
    %c0_i32_0 = arith.constant 0 : i32
    %c0_i32_1 = arith.constant 0 : i32
    return %c0_i32, %c0_i32_0 : i32, i32
  }
  func.func @transform_2(%arg0: i32) -> (i32, i32) {
    %c0_i32 = arith.constant 0 : i32
    %c0_i32_0 = arith.constant 0 : i32
    %c0_i32_1 = arith.constant 0 : i32
    return %c0_i32, %c0_i32_0 : i32, i32
  }
  func.func @transform_3(%arg0: i32) -> (i32, i32) {
    %c0_i32 = arith.constant 0 : i32
    %c0_i32_0 = arith.constant 0 : i32
    %c0_i32_1 = arith.constant 0 : i32
    return %c0_i32, %c0_i32_0 : i32, i32
  }
  func.func @transform_4(%arg0: i32) -> (i32, i32) {
    %c0_i32 = arith.constant 0 : i32
    %c0_i32_0 = arith.constant 0 : i32
    %c0_i32_1 = arith.constant 0 : i32
    return %c0_i32, %c0_i32_0 : i32, i32
  }
  func.func @transform_5(%arg0: i32) -> (i32, i32) {
    %c0_i32 = arith.constant 0 : i32
    %c0_i32_0 = arith.constant 0 : i32
    %c0_i32_1 = arith.constant 0 : i32
    return %c0_i32, %c0_i32_0 : i32, i32
  }
  func.func @transform_6(%arg0: i32) -> (i32, i32) {
    %c0_i32 = arith.constant 0 : i32
    %c0_i32_0 = arith.constant 0 : i32
    %c0_i32_1 = arith.constant 0 : i32
    return %c0_i32, %c0_i32_0 : i32, i32
  }
  func.func @transform_7(%arg0: i32) -> (i32, i32) {
    %c0_i32 = arith.constant 0 : i32
    %c0_i32_0 = arith.constant 0 : i32
    return %arg0, %c0_i32 : i32, i32
  }
}

</mosaic_0001>

<llo_original>
// kernel: plane_net_forward.1
$region0: #{plane_net_forward.1}
  #allocation0 [shape = 'u32[]', space=smem, size = 0x4, offset = 0x4, fixed_abs, tag = 'smem constant byte address 0x4 - core index']
  #allocation1 [shape = 'u32[144,128]{1,0:T(1,128)}', space=vmem, size = 0x12000, scoped, tag = 'internal scratch']
  %s0 = inlined_call_operand.vmem [shape: f32[304,2], index: 0, kind: input, shape index: {}]
  %s1 = inlined_call_operand.vmem [shape: f32[2,512], index: 1, kind: input, shape index: {}]
  %s2 = inlined_call_operand.vmem [shape: f32[1,512], index: 2, kind: input, shape index: {}]
  %s3 = inlined_call_operand.vmem [shape: f32[512,128], index: 3, kind: input, shape index: {}]
  %s4 = inlined_call_operand.vmem [shape: f32[1,128], index: 4, kind: input, shape index: {}]
  %s5 = inlined_call_operand.vmem [shape: f32[128,128], index: 5, kind: input, shape index: {}]
  %s6 = inlined_call_operand.vmem [shape: f32[1,128], index: 6, kind: input, shape index: {}]
  %s7 = inlined_call_operand.vmem [shape: f32[304,128], index: 7, kind: output, shape index: {}]
  %s8 = sld [smem:[#allocation0]]
  $region38: #{plane_net_forward.1} parent=0
    _
  %s10 = ssub.s32 1, %s8
  %s11 = scalar_select 0, %s10, %s8
  // Predicated region
  $region2: #{plane_net_forward.1} parent=0 // pred_check
    _
  $region3: #{plane_net_forward.1} parent=0 // pred_check_branch
    %13 = sbr.rel (0) target = $region5
  $region4: #{plane_net_forward.1} parent=0 // pred_region
    _
  $region5: #{plane_net_forward.1} parent=0 // pred_fallthru
    _
  // Predicated region
  $region6: #{plane_net_forward.1} parent=0 // pred_check
    _
  $region7: #{plane_net_forward.1} parent=0 // pred_check_branch
    %15 = sbr.rel (0) target = $region9
  $region8: #{plane_net_forward.1} parent=0 // pred_region
    _
  $region9: #{plane_net_forward.1} parent=0 // pred_fallthru
    _
  // Predicated region
  $region10: #{plane_net_forward.1} parent=0 // pred_check
    _
  $region11: #{plane_net_forward.1} parent=0 // pred_check_branch
    %17 = sbr.rel (0) target = $region13
  $region12: #{plane_net_forward.1} parent=0 // pred_region
    _
  $region13: #{plane_net_forward.1} parent=0 // pred_fallthru
    _
  // Predicated region
  $region14: #{plane_net_forward.1} parent=0 // pred_check
    _
  $region15: #{plane_net_forward.1} parent=0 // pred_check_branch
    %19 = sbr.rel (0) target = $region17
  $region16: #{plane_net_forward.1} parent=0 // pred_region
    _
  $region17: #{plane_net_forward.1} parent=0 // pred_fallthru
    _
  // Predicated region
  $region18: #{plane_net_forward.1} parent=0 // pred_check
    _
  $region19: #{plane_net_forward.1} parent=0 // pred_check_branch
    %21 = sbr.rel (0) target = $region21
  $region20: #{plane_net_forward.1} parent=0 // pred_region
    _
  $region21: #{plane_net_forward.1} parent=0 // pred_fallthru
    _
  // Predicated region
  $region22: #{plane_net_forward.1} parent=0 // pred_check
    _
  $region23: #{plane_net_forward.1} parent=0 // pred_check_branch
    %23 = sbr.rel (0) target = $region25
  $region24: #{plane_net_forward.1} parent=0 // pred_region
    _
  $region25: #{plane_net_forward.1} parent=0 // pred_fallthru
    _
  // Predicated region
  $region26: #{plane_net_forward.1} parent=0 // pred_check
    _
  $region27: #{plane_net_forward.1} parent=0 // pred_check_branch
    %25 = sbr.rel (0) target = $region29
  $region28: #{plane_net_forward.1} parent=0 // pred_region
    _
  $region29: #{plane_net_forward.1} parent=0 // pred_fallthru
    _
  %v26 = vld [vmem:[%s0] sm:$0xff]
  %v27 = vld [vmem:[%s0 + $0x8] sm:$0xff]
  %v28 = vld [vmem:[%s0 + $0x10] sm:$0xff]
  %v29 = vld [vmem:[%s0 + $0x18] sm:$0xff]
  %v30 = vld [vmem:[%s0 + $0x20] sm:$0xff]
  %v31 = vld [vmem:[%s0 + $0x28] sm:$0xff]
  %v32 = vld [vmem:[%s0 + $0x30] sm:$0xff]
  %v33 = vld [vmem:[%s0 + $0x38] sm:$0xff]
  %v34 = vld [vmem:[%s0 + $0x40] sm:$0xff]
  %v35 = vld [vmem:[%s0 + $0x48] sm:$0xff]
  %v36 = vld [vmem:[%s0 + $0x50] sm:$0xff]
  %v37 = vld [vmem:[%s0 + $0x58] sm:$0xff]
  %v38 = vld [vmem:[%s0 + $0x60] sm:$0xff]
  %v39 = vld [vmem:[%s0 + $0x68] sm:$0xff]
  %v40 = vld [vmem:[%s0 + $0x70] sm:$0xff]
  %v41 = vld [vmem:[%s0 + $0x78] sm:$0xff]
  %v42 = vld [vmem:[%s0 + $0x80] sm:$0xff]
  %v43 = vld [vmem:[%s0 + $0x88] sm:$0xff]
  %v44 = vld [vmem:[%s0 + $0x90] sm:$0xff]
  %v45 = vld [vmem:[%s0 + $0x98] sm:$0xff]
  %v46 = vld [vmem:[%s0 + $0xa0] sm:$0xff]
  %v47 = vld [vmem:[%s0 + $0xa8] sm:$0xff]
  %v48 = vld [vmem:[%s0 + $0xb0] sm:$0xff]
  %v49 = vld [vmem:[%s0 + $0xb8] sm:$0xff]
  %v50 = vld [vmem:[%s0 + $0xc0] sm:$0xff]
  %v51 = vld [vmem:[%s0 + $0xc8] sm:$0xff]
  %v52 = vld [vmem:[%s0 + $0xd0] sm:$0xff]
  %v53 = vld [vmem:[%s0 + $0xd8] sm:$0xff]
  %v54 = vld [vmem:[%s0 + $0xe0] sm:$0xff]
  %v55 = vld [vmem:[%s0 + $0xe8] sm:$0xff]
  %v56 = vld [vmem:[%s0 + $0xf0] sm:$0xff]
  %v57 = vld [vmem:[%s0 + $0xf8] sm:$0xff]
  %v58 = vld [vmem:[%s0 + $0x100] sm:$0xff]
  %v59 = vld [vmem:[%s0 + $0x108] sm:$0xff]
  %v60 = vld [vmem:[%s0 + $0x110] sm:$0xff]
  %v61 = vld [vmem:[%s0 + $0x118] sm:$0xff]
  %v62 = vld [vmem:[%s0 + $0x120] sm:$0xff]
  %v63 = vld [vmem:[%s0 + $0x128] sm:$0xff]
  %v64 = vld [vmem:[%s1] sm:$0xff]
  %66 = vset.pattern.permute.xlu0 0
  %67 = vperm.xlu0 %66, %v26
  %v68 = vpop.permute.xlu0 %67
  %71 = vset.pattern.permute.xlu0 0
  %72 = vperm.xlu0 %71, %v27
  %v73 = vpop.permute.xlu0 %72
  %76 = vset.pattern.permute.xlu0 0
  %77 = vperm.xlu0 %76, %v28
  %v78 = vpop.permute.xlu0 %77
  %81 = vset.pattern.permute.xlu0 0
  %82 = vperm.xlu0 %81, %v29
  %v83 = vpop.permute.xlu0 %82
  %86 = vset.pattern.permute.xlu0 0
  %87 = vperm.xlu0 %86, %v30
  %v88 = vpop.permute.xlu0 %87
  %91 = vset.pattern.permute.xlu0 0
  %92 = vperm.xlu0 %91, %v31
  %v93 = vpop.permute.xlu0 %92
  %96 = vset.pattern.permute.xlu0 0
  %97 = vperm.xlu0 %96, %v32
  %v98 = vpop.permute.xlu0 %97
  %101 = vset.pattern.permute.xlu0 0
  %102 = vperm.xlu0 %101, %v33
  %v103 = vpop.permute.xlu0 %102
  %106 = vset.pattern.permute.xlu0 0
  %107 = vperm.xlu0 %106, %v34
  %v108 = vpop.permute.xlu0 %107
  %111 = vset.pattern.permute.xlu0 0
  %112 = vperm.xlu0 %111, %v35
  %v113 = vpop.permute.xlu0 %112
  %116 = vset.pattern.permute.xlu0 0
  %117 = vperm.xlu0 %116, %v36
  %v118 = vpop.permute.xlu0 %117
  %121 = vset.pattern.permute.xlu0 0
  %122 = vperm.xlu0 %121, %v37
  %v123 = vpop.permute.xlu0 %122
  %126 = vset.pattern.permute.xlu0 0
  %127 = vperm.xlu0 %126, %v38
  %v128 = vpop.permute.xlu0 %127
  %131 = vset.pattern.permute.xlu0 0
  %132 = vperm.xlu0 %131, %v39
  %v133 = vpop.permute.xlu0 %132
  %136 = vset.pattern.permute.xlu0 0
  %137 = vperm.xlu0 %136, %v40
  %v138 = vpop.permute.xlu0 %137
  %141 = vset.pattern.permute.xlu0 0
  %142 = vperm.xlu0 %141, %v41
  %v143 = vpop.permute.xlu0 %142
  %146 = vset.pattern.permute.xlu0 0
  %147 = vperm.xlu0 %146, %v42
  %v148 = vpop.permute.xlu0 %147
  %151 = vset.pattern.permute.xlu0 0
  %152 = vperm.xlu0 %151, %v43
  %v153 = vpop.permute.xlu0 %152
  %156 = vset.pattern.permute.xlu0 0
  %157 = vperm.xlu0 %156, %v44
  %v158 = vpop.permute.xlu0 %157
  %161 = vset.pattern.permute.xlu0 0
  %162 = vperm.xlu0 %161, %v45
  %v163 = vpop.permute.xlu0 %162
  %166 = vset.pattern.permute.xlu0 0
  %167 = vperm.xlu0 %166, %v46
  %v168 = vpop.permute.xlu0 %167
  %171 = vset.pattern.permute.xlu0 0
  %172 = vperm.xlu0 %171, %v47
  %v173 = vpop.permute.xlu0 %172
  %176 = vset.pattern.permute.xlu0 0
  %177 = vperm.xlu0 %176, %v48
  %v178 = vpop.permute.xlu0 %177
  %181 = vset.pattern.permute.xlu0 0
  %182 = vperm.xlu0 %181, %v49
  %v183 = vpop.permute.xlu0 %182
  %186 = vset.pattern.permute.xlu0 0
  %187 = vperm.xlu0 %186, %v50
  %v188 = vpop.permute.xlu0 %187
  %191 = vset.pattern.permute.xlu0 0
  %192 = vperm.xlu0 %191, %v51
  %v193 = vpop.permute.xlu0 %192
  %196 = vset.pattern.permute.xlu0 0
  %197 = vperm.xlu0 %196, %v52
  %v198 = vpop.permute.xlu0 %197
  %201 = vset.pattern.permute.xlu0 0
  %202 = vperm.xlu0 %201, %v53
  %v203 = vpop.permute.xlu0 %202
  %206 = vset.pattern.permute.xlu0 0
  %207 = vperm.xlu0 %206, %v54
  %v208 = vpop.permute.xlu0 %207
  %211 = vset.pattern.permute.xlu0 0
  %212 = vperm.xlu0 %211, %v55
  %v213 = vpop.permute.xlu0 %212
  %216 = vset.pattern.permute.xlu0 0
  %217 = vperm.xlu0 %216, %v56
  %v218 = vpop.permute.xlu0 %217
  %221 = vset.pattern.permute.xlu0 0
  %222 = vperm.xlu0 %221, %v57
  %v223 = vpop.permute.xlu0 %222
  %226 = vset.pattern.permute.xlu0 0
  %227 = vperm.xlu0 %226, %v58
  %v228 = vpop.permute.xlu0 %227
  %231 = vset.pattern.permute.xlu0 0
  %232 = vperm.xlu0 %231, %v59
  %v233 = vpop.permute.xlu0 %232
  %236 = vset.pattern.permute.xlu0 0
  %237 = vperm.xlu0 %236, %v60
  %v238 = vpop.permute.xlu0 %237
  %241 = vset.pattern.permute.xlu0 0
  %242 = vperm.xlu0 %241, %v61
  %v243 = vpop.permute.xlu0 %242
  %246 = vset.pattern.permute.xlu0 0
  %247 = vperm.xlu0 %246, %v62
  %v248 = vpop.permute.xlu0 %247
  %251 = vset.pattern.permute.xlu0 0
  %252 = vperm.xlu0 %251, %v63
  %v253 = vpop.permute.xlu0 %252
  %v256 = vlaneseq
  %v257 = vshrl.u32 %v256, 7
  %v258 = vsub.s32 0, %v257
  %v259 = vrot.slane %v64, %v258
  %v260 = vlaneseq
  %v261 = vshrl.u32 %v260, 7
  %v262 = vsub.s32 2, %v261
  %v263 = vrot.slane %v64, %v262
  %v264 = vlaneseq
  %v265 = vshrl.u32 %v264, 7
  %v266 = vsub.s32 4, %v265
  %v267 = vrot.slane %v64, %v266
  %v268 = vlaneseq
  %v269 = vshrl.u32 %v268, 7
  %v270 = vsub.s32 6, %v269
  %v271 = vrot.slane %v64, %v270
  %v276 = vlaneseq
  %v277 = vshrl.u32 %v276, 7
  %v278 = vsub.s32 0, %v277
  %v279 = vrot.slane %v259, %v278
  %v280 = vlaneseq
  %v281 = vshrl.u32 %v280, 7
  %v282 = vsub.s32 0, %v281
  %v283 = vrot.slane %v263, %v282
  %v284 = vlaneseq
  %v285 = vshrl.u32 %v284, 7
  %v286 = vsub.s32 0, %v285
  %v287 = vrot.slane %v267, %v286
  %v288 = vlaneseq
  %v289 = vshrl.u32 %v288, 7
  %v290 = vsub.s32 0, %v289
  %v291 = vrot.slane %v271, %v290
  %v292 = vmul.f32 %v68, %v279
  %v293 = vmul.f32 %v68, %v283
  %v294 = vmul.f32 %v68, %v287
  %v295 = vmul.f32 %v68, %v291
  %v296 = vmul.f32 %v73, %v279
  %v297 = vmul.f32 %v73, %v283
  %v298 = vmul.f32 %v73, %v287
  %v299 = vmul.f32 %v73, %v291
  %v300 = vmul.f32 %v78, %v279
  %v301 = vmul.f32 %v78, %v283
  %v302 = vmul.f32 %v78, %v287
  %v303 = vmul.f32 %v78, %v291
  %v304 = vmul.f32 %v83, %v279
  %v305 = vmul.f32 %v83, %v283
  %v306 = vmul.f32 %v83, %v287
  %v307 = vmul.f32 %v83, %v291
  %v308 = vmul.f32 %v88, %v279
  %v309 = vmul.f32 %v88, %v283
  %v310 = vmul.f32 %v88, %v287
  %v311 = vmul.f32 %v88, %v291
  %v312 = vmul.f32 %v93, %v279
  %v313 = vmul.f32 %v93, %v283
  %v314 = vmul.f32 %v93, %v287
  %v315 = vmul.f32 %v93, %v291
  %v316 = vmul.f32 %v98, %v279
  %v317 = vmul.f32 %v98, %v283
  %v318 = vmul.f32 %v98, %v287
  %v319 = vmul.f32 %v98, %v291
  %v320 = vmul.f32 %v103, %v279
  %v321 = vmul.f32 %v103, %v283
  %v322 = vmul.f32 %v103, %v287
  %v323 = vmul.f32 %v103, %v291
  %v324 = vmul.f32 %v108, %v279
  %v325 = vmul.f32 %v108, %v283
  %v326 = vmul.f32 %v108, %v287
  %v327 = vmul.f32 %v108, %v291
  %v328 = vmul.f32 %v113, %v279
  %v329 = vmul.f32 %v113, %v283
  %v330 = vmul.f32 %v113, %v287
  %v331 = vmul.f32 %v113, %v291
  %v332 = vmul.f32 %v118, %v279
  %v333 = vmul.f32 %v118, %v283
  %v334 = vmul.f32 %v118, %v287
  %v335 = vmul.f32 %v118, %v291
  %v336 = vmul.f32 %v123, %v279
  %v337 = vmul.f32 %v123, %v283
  %v338 = vmul.f32 %v123, %v287
  %v339 = vmul.f32 %v123, %v291
  %v340 = vmul.f32 %v128, %v279
  %v341 = vmul.f32 %v128, %v283
  %v342 = vmul.f32 %v128, %v287
  %v343 = vmul.f32 %v128, %v291
  %v344 = vmul.f32 %v133, %v279
  %v345 = vmul.f32 %v133, %v283
  %v346 = vmul.f32 %v133, %v287
  %v347 = vmul.f32 %v133, %v291
  %v348 = vmul.f32 %v138, %v279
  %v349 = vmul.f32 %v138, %v283
  %v350 = vmul.f32 %v138, %v287
  %v351 = vmul.f32 %v138, %v291
  %v352 = vmul.f32 %v143, %v279
  %v353 = vmul.f32 %v143, %v283
  %v354 = vmul.f32 %v143, %v287
  %v355 = vmul.f32 %v143, %v291
  %v356 = vmul.f32 %v148, %v279
  %v357 = vmul.f32 %v148, %v283
  %v358 = vmul.f32 %v148, %v287
  %v359 = vmul.f32 %v148, %v291
  %v360 = vmul.f32 %v153, %v279
  %v361 = vmul.f32 %v153, %v283
  %v362 = vmul.f32 %v153, %v287
  %v363 = vmul.f32 %v153, %v291
  %v364 = vmul.f32 %v158, %v279
  %v365 = vmul.f32 %v158, %v283
  %v366 = vmul.f32 %v158, %v287
  %v367 = vmul.f32 %v158, %v291
  %v368 = vmul.f32 %v163, %v279
  %v369 = vmul.f32 %v163, %v283
  %v370 = vmul.f32 %v163, %v287
  %v371 = vmul.f32 %v163, %v291
  %v372 = vmul.f32 %v168, %v279
  %v373 = vmul.f32 %v168, %v283
  %v374 = vmul.f32 %v168, %v287
  %v375 = vmul.f32 %v168, %v291
  %v376 = vmul.f32 %v173, %v279
  %v377 = vmul.f32 %v173, %v283
  %v378 = vmul.f32 %v173, %v287
  %v379 = vmul.f32 %v173, %v291
  %v380 = vmul.f32 %v178, %v279
  %v381 = vmul.f32 %v178, %v283
  %v382 = vmul.f32 %v178, %v287
  %v383 = vmul.f32 %v178, %v291
  %v384 = vmul.f32 %v183, %v279
  %v385 = vmul.f32 %v183, %v283
  %v386 = vmul.f32 %v183, %v287
  %v387 = vmul.f32 %v183, %v291
  %v388 = vmul.f32 %v188, %v279
  %v389 = vmul.f32 %v188, %v283
  %v390 = vmul.f32 %v188, %v287
  %v391 = vmul.f32 %v188, %v291
  %v392 = vmul.f32 %v193, %v279
  %v393 = vmul.f32 %v193, %v283
  %v394 = vmul.f32 %v193, %v287
  %v395 = vmul.f32 %v193, %v291
  %v396 = vmul.f32 %v198, %v279
  %v397 = vmul.f32 %v198, %v283
  %v398 = vmul.f32 %v198, %v287
  %v399 = vmul.f32 %v198, %v291
  %v400 = vmul.f32 %v203, %v279
  %v401 = vmul.f32 %v203, %v283
  %v402 = vmul.f32 %v203, %v287
  %v403 = vmul.f32 %v203, %v291
  %v404 = vmul.f32 %v208, %v279
  %v405 = vmul.f32 %v208, %v283
  %v406 = vmul.f32 %v208, %v287
  %v407 = vmul.f32 %v208, %v291
  %v408 = vmul.f32 %v213, %v279
  %v409 = vmul.f32 %v213, %v283
  %v410 = vmul.f32 %v213, %v287
  %v411 = vmul.f32 %v213, %v291
  %v412 = vmul.f32 %v218, %v279
  %v413 = vmul.f32 %v218, %v283
  %v414 = vmul.f32 %v218, %v287
  %v415 = vmul.f32 %v218, %v291
  %v416 = vmul.f32 %v223, %v279
  %v417 = vmul.f32 %v223, %v283
  %v418 = vmul.f32 %v223, %v287
  %v419 = vmul.f32 %v223, %v291
  %v420 = vmul.f32 %v228, %v279
  %v421 = vmul.f32 %v228, %v283
  %v422 = vmul.f32 %v228, %v287
  %v423 = vmul.f32 %v228, %v291
  %v424 = vmul.f32 %v233, %v279
  %v425 = vmul.f32 %v233, %v283
  %v426 = vmul.f32 %v233, %v287
  %v427 = vmul.f32 %v233, %v291
  %v428 = vmul.f32 %v238, %v279
  %v429 = vmul.f32 %v238, %v283
  %v430 = vmul.f32 %v238, %v287
  %v431 = vmul.f32 %v238, %v291
  %v432 = vmul.f32 %v243, %v279
  %v433 = vmul.f32 %v243, %v283
  %v434 = vmul.f32 %v243, %v287
  %v435 = vmul.f32 %v243, %v291
  %v436 = vmul.f32 %v248, %v279
  %v437 = vmul.f32 %v248, %v283
  %v438 = vmul.f32 %v248, %v287
  %v439 = vmul.f32 %v248, %v291
  %v440 = vmul.f32 %v253, %v279
  %v441 = vmul.f32 %v253, %v283
  %v442 = vmul.f32 %v253, %v287
  %v443 = vmul.f32 %v253, %v291
  %444 = vset.pattern.permute.xlu0 1
  %445 = vperm.xlu0 %444, %v26
  %v446 = vpop.permute.xlu0 %445
  %448 = vset.pattern.permute.xlu0 1
  %449 = vperm.xlu0 %448, %v27
  %v450 = vpop.permute.xlu0 %449
  %452 = vset.pattern.permute.xlu0 1
  %453 = vperm.xlu0 %452, %v28
  %v454 = vpop.permute.xlu0 %453
  %456 = vset.pattern.permute.xlu0 1
  %457 = vperm.xlu0 %456, %v29
  %v458 = vpop.permute.xlu0 %457
  %460 = vset.pattern.permute.xlu0 1
  %461 = vperm.xlu0 %460, %v30
  %v462 = vpop.permute.xlu0 %461
  %464 = vset.pattern.permute.xlu0 1
  %465 = vperm.xlu0 %464, %v31
  %v466 = vpop.permute.xlu0 %465
  %468 = vset.pattern.permute.xlu0 1
  %469 = vperm.xlu0 %468, %v32
  %v470 = vpop.permute.xlu0 %469
  %472 = vset.pattern.permute.xlu0 1
  %473 = vperm.xlu0 %472, %v33
  %v474 = vpop.permute.xlu0 %473
  %476 = vset.pattern.permute.xlu0 1
  %477 = vperm.xlu0 %476, %v34
  %v478 = vpop.permute.xlu0 %477
  %480 = vset.pattern.permute.xlu0 1
  %481 = vperm.xlu0 %480, %v35
  %v482 = vpop.permute.xlu0 %481
  %484 = vset.pattern.permute.xlu0 1
  %485 = vperm.xlu0 %484, %v36
  %v486 = vpop.permute.xlu0 %485
  %488 = vset.pattern.permute.xlu0 1
  %489 = vperm.xlu0 %488, %v37
  %v490 = vpop.permute.xlu0 %489
  %492 = vset.pattern.permute.xlu0 1
  %493 = vperm.xlu0 %492, %v38
  %v494 = vpop.permute.xlu0 %493
  %496 = vset.pattern.permute.xlu0 1
  %497 = vperm.xlu0 %496, %v39
  %v498 = vpop.permute.xlu0 %497
  %500 = vset.pattern.permute.xlu0 1
  %501 = vperm.xlu0 %500, %v40
  %v502 = vpop.permute.xlu0 %501
  %504 = vset.pattern.permute.xlu0 1
  %505 = vperm.xlu0 %504, %v41
  %v506 = vpop.permute.xlu0 %505
  %508 = vset.pattern.permute.xlu0 1
  %509 = vperm.xlu0 %508, %v42
  %v510 = vpop.permute.xlu0 %509
  %512 = vset.pattern.permute.xlu0 1
  %513 = vperm.xlu0 %512, %v43
  %v514 = vpop.permute.xlu0 %513
  %516 = vset.pattern.permute.xlu0 1
  %517 = vperm.xlu0 %516, %v44
  %v518 = vpop.permute.xlu0 %517
  %520 = vset.pattern.permute.xlu0 1
  %521 = vperm.xlu0 %520, %v45
  %v522 = vpop.permute.xlu0 %521
  %524 = vset.pattern.permute.xlu0 1
  %525 = vperm.xlu0 %524, %v46
  %v526 = vpop.permute.xlu0 %525
  %528 = vset.pattern.permute.xlu0 1
  %529 = vperm.xlu0 %528, %v47
  %v530 = vpop.permute.xlu0 %529
  %532 = vset.pattern.permute.xlu0 1
  %533 = vperm.xlu0 %532, %v48
  %v534 = vpop.permute.xlu0 %533
  %536 = vset.pattern.permute.xlu0 1
  %537 = vperm.xlu0 %536, %v49
  %v538 = vpop.permute.xlu0 %537
  %540 = vset.pattern.permute.xlu0 1
  %541 = vperm.xlu0 %540, %v50
  %v542 = vpop.permute.xlu0 %541
  %544 = vset.pattern.permute.xlu0 1
  %545 = vperm.xlu0 %544, %v51
  %v546 = vpop.permute.xlu0 %545
  %548 = vset.pattern.permute.xlu0 1
  %549 = vperm.xlu0 %548, %v52
  %v550 = vpop.permute.xlu0 %549
  %552 = vset.pattern.permute.xlu0 1
  %553 = vperm.xlu0 %552, %v53
  %v554 = vpop.permute.xlu0 %553
  %556 = vset.pattern.permute.xlu0 1
  %557 = vperm.xlu0 %556, %v54
  %v558 = vpop.permute.xlu0 %557
  %560 = vset.pattern.permute.xlu0 1
  %561 = vperm.xlu0 %560, %v55
  %v562 = vpop.permute.xlu0 %561
  %564 = vset.pattern.permute.xlu0 1
  %565 = vperm.xlu0 %564, %v56
  %v566 = vpop.permute.xlu0 %565
  %568 = vset.pattern.permute.xlu0 1
  %569 = vperm.xlu0 %568, %v57
  %v570 = vpop.permute.xlu0 %569
  %572 = vset.pattern.permute.xlu0 1
  %573 = vperm.xlu0 %572, %v58
  %v574 = vpop.permute.xlu0 %573
  %576 = vset.pattern.permute.xlu0 1
  %577 = vperm.xlu0 %576, %v59
  %v578 = vpop.permute.xlu0 %577
  %580 = vset.pattern.permute.xlu0 1
  %581 = vperm.xlu0 %580, %v60
  %v582 = vpop.permute.xlu0 %581
  %584 = vset.pattern.permute.xlu0 1
  %585 = vperm.xlu0 %584, %v61
  %v586 = vpop.permute.xlu0 %585
  %588 = vset.pattern.permute.xlu0 1
  %589 = vperm.xlu0 %588, %v62
  %v590 = vpop.permute.xlu0 %589
  %592 = vset.pattern.permute.xlu0 1
  %593 = vperm.xlu0 %592, %v63
  %v594 = vpop.permute.xlu0 %593
  %v596 = vlaneseq
  %v597 = vshrl.u32 %v596, 7
  %v598 = vsub.s32 1, %v597
  %v599 = vrot.slane %v64, %v598
  %v600 = vlaneseq
  %v601 = vshrl.u32 %v600, 7
  %v602 = vsub.s32 3, %v601
  %v603 = vrot.slane %v64, %v602
  %v604 = vlaneseq
  %v605 = vshrl.u32 %v604, 7
  %v606 = vsub.s32 5, %v605
  %v607 = vrot.slane %v64, %v606
  %v608 = vlaneseq
  %v609 = vshrl.u32 %v608, 7
  %v610 = vsub.s32 7, %v609
  %v611 = vrot.slane %v64, %v610
  %v616 = vlaneseq
  %v617 = vshrl.u32 %v616, 7
  %v618 = vsub.s32 1, %v617
  %v619 = vrot.slane %v599, %v618
  %v620 = vlaneseq
  %v621 = vshrl.u32 %v620, 7
  %v622 = vsub.s32 1, %v621
  %v623 = vrot.slane %v603, %v622
  %v624 = vlaneseq
  %v625 = vshrl.u32 %v624, 7
  %v626 = vsub.s32 1, %v625
  %v627 = vrot.slane %v607, %v626
  %v628 = vlaneseq
  %v629 = vshrl.u32 %v628, 7
  %v630 = vsub.s32 1, %v629
  %v631 = vrot.slane %v611, %v630
  %v632 = vmul.f32 %v446, %v619
  %v633 = vmul.f32 %v446, %v623
  %v634 = vmul.f32 %v446, %v627
  %v635 = vmul.f32 %v446, %v631
  %v636 = vmul.f32 %v450, %v619
  %v637 = vmul.f32 %v450, %v623
  %v638 = vmul.f32 %v450, %v627
  %v639 = vmul.f32 %v450, %v631
  %v640 = vmul.f32 %v454, %v619
  %v641 = vmul.f32 %v454, %v623
  %v642 = vmul.f32 %v454, %v627
  %v643 = vmul.f32 %v454, %v631
  %v644 = vmul.f32 %v458, %v619
  %v645 = vmul.f32 %v458, %v623
  %v646 = vmul.f32 %v458, %v627
  %v647 = vmul.f32 %v458, %v631
  %v648 = vmul.f32 %v462, %v619
  %v649 = vmul.f32 %v462, %v623
  %v650 = vmul.f32 %v462, %v627
  %v651 = vmul.f32 %v462, %v631
  %v652 = vmul.f32 %v466, %v619
  %v653 = vmul.f32 %v466, %v623
  %v654 = vmul.f32 %v466, %v627
  %v655 = vmul.f32 %v466, %v631
  %v656 = vmul.f32 %v470, %v619
  %v657 = vmul.f32 %v470, %v623
  %v658 = vmul.f32 %v470, %v627
  %v659 = vmul.f32 %v470, %v631
  %v660 = vmul.f32 %v474, %v619
  %v661 = vmul.f32 %v474, %v623
  %v662 = vmul.f32 %v474, %v627
  %v663 = vmul.f32 %v474, %v631
  %v664 = vmul.f32 %v478, %v619
  %v665 = vmul.f32 %v478, %v623
  %v666 = vmul.f32 %v478, %v627
  %v667 = vmul.f32 %v478, %v631
  %v668 = vmul.f32 %v482, %v619
  %v669 = vmul.f32 %v482, %v623
  %v670 = vmul.f32 %v482, %v627
  %v671 = vmul.f32 %v482, %v631
  %v672 = vmul.f32 %v486, %v619
  %v673 = vmul.f32 %v486, %v623
  %v674 = vmul.f32 %v486, %v627
  %v675 = vmul.f32 %v486, %v631
  %v676 = vmul.f32 %v490, %v619
  %v677 = vmul.f32 %v490, %v623
  %v678 = vmul.f32 %v490, %v627
  %v679 = vmul.f32 %v490, %v631
  %v680 = vmul.f32 %v494, %v619
  %v681 = vmul.f32 %v494, %v623
  %v682 = vmul.f32 %v494, %v627
  %v683 = vmul.f32 %v494, %v631
  %v684 = vmul.f32 %v498, %v619
  %v685 = vmul.f32 %v498, %v623
  %v686 = vmul.f32 %v498, %v627
  %v687 = vmul.f32 %v498, %v631
  %v688 = vmul.f32 %v502, %v619
  %v689 = vmul.f32 %v502, %v623
  %v690 = vmul.f32 %v502, %v627
  %v691 = vmul.f32 %v502, %v631
  %v692 = vmul.f32 %v506, %v619
  %v693 = vmul.f32 %v506, %v623
  %v694 = vmul.f32 %v506, %v627
  %v695 = vmul.f32 %v506, %v631
  %v696 = vmul.f32 %v510, %v619
  %v697 = vmul.f32 %v510, %v623
  %v698 = vmul.f32 %v510, %v627
  %v699 = vmul.f32 %v510, %v631
  %v700 = vmul.f32 %v514, %v619
  %v701 = vmul.f32 %v514, %v623
  %v702 = vmul.f32 %v514, %v627
  %v703 = vmul.f32 %v514, %v631
  %v704 = vmul.f32 %v518, %v619
  %v705 = vmul.f32 %v518, %v623
  %v706 = vmul.f32 %v518, %v627
  %v707 = vmul.f32 %v518, %v631
  %v708 = vmul.f32 %v522, %v619
  %v709 = vmul.f32 %v522, %v623
  %v710 = vmul.f32 %v522, %v627
  %v711 = vmul.f32 %v522, %v631
  %v712 = vmul.f32 %v526, %v619
  %v713 = vmul.f32 %v526, %v623
  %v714 = vmul.f32 %v526, %v627
  %v715 = vmul.f32 %v526, %v631
  %v716 = vmul.f32 %v530, %v619
  %v717 = vmul.f32 %v530, %v623
  %v718 = vmul.f32 %v530, %v627
  %v719 = vmul.f32 %v530, %v631
  %v720 = vmul.f32 %v534, %v619
  %v721 = vmul.f32 %v534, %v623
  %v722 = vmul.f32 %v534, %v627
  %v723 = vmul.f32 %v534, %v631
  %v724 = vmul.f32 %v538, %v619
  %v725 = vmul.f32 %v538, %v623
  %v726 = vmul.f32 %v538, %v627
  %v727 = vmul.f32 %v538, %v631
  %v728 = vmul.f32 %v542, %v619
  %v729 = vmul.f32 %v542, %v623
  %v730 = vmul.f32 %v542, %v627
  %v731 = vmul.f32 %v542, %v631
  %v732 = vmul.f32 %v546, %v619
  %v733 = vmul.f32 %v546, %v623
  %v734 = vmul.f32 %v546, %v627
  %v735 = vmul.f32 %v546, %v631
  %v736 = vmul.f32 %v550, %v619
  %v737 = vmul.f32 %v550, %v623
  %v738 = vmul.f32 %v550, %v627
  %v739 = vmul.f32 %v550, %v631
  %v740 = vmul.f32 %v554, %v619
  %v741 = vmul.f32 %v554, %v623
  %v742 = vmul.f32 %v554, %v627
  %v743 = vmul.f32 %v554, %v631
  %v744 = vmul.f32 %v558, %v619
  %v745 = vmul.f32 %v558, %v623
  %v746 = vmul.f32 %v558, %v627
  %v747 = vmul.f32 %v558, %v631
  %v748 = vmul.f32 %v562, %v619
  %v749 = vmul.f32 %v562, %v623
  %v750 = vmul.f32 %v562, %v627
  %v751 = vmul.f32 %v562, %v631
  %v752 = vmul.f32 %v566, %v619
  %v753 = vmul.f32 %v566, %v623
  %v754 = vmul.f32 %v566, %v627
  %v755 = vmul.f32 %v566, %v631
  %v756 = vmul.f32 %v570, %v619
  %v757 = vmul.f32 %v570, %v623
  %v758 = vmul.f32 %v570, %v627
  %v759 = vmul.f32 %v570, %v631
  %v760 = vmul.f32 %v574, %v619
  %v761 = vmul.f32 %v574, %v623
  %v762 = vmul.f32 %v574, %v627
  %v763 = vmul.f32 %v574, %v631
  %v764 = vmul.f32 %v578, %v619
  %v765 = vmul.f32 %v578, %v623
  %v766 = vmul.f32 %v578, %v627
  %v767 = vmul.f32 %v578, %v631
  %v768 = vmul.f32 %v582, %v619
  %v769 = vmul.f32 %v582, %v623
  %v770 = vmul.f32 %v582, %v627
  %v771 = vmul.f32 %v582, %v631
  %v772 = vmul.f32 %v586, %v619
  %v773 = vmul.f32 %v586, %v623
  %v774 = vmul.f32 %v586, %v627
  %v775 = vmul.f32 %v586, %v631
  %v776 = vmul.f32 %v590, %v619
  %v777 = vmul.f32 %v590, %v623
  %v778 = vmul.f32 %v590, %v627
  %v779 = vmul.f32 %v590, %v631
  %v780 = vmul.f32 %v594, %v619
  %v781 = vmul.f32 %v594, %v623
  %v782 = vmul.f32 %v594, %v627
  %v783 = vmul.f32 %v594, %v631
  %v784 = vadd.f32 %v292, %v632
  %v785 = vadd.f32 %v293, %v633
  %v786 = vadd.f32 %v294, %v634
  %v787 = vadd.f32 %v295, %v635
  %v788 = vadd.f32 %v296, %v636
  %v789 = vadd.f32 %v297, %v637
  %v790 = vadd.f32 %v298, %v638
  %v791 = vadd.f32 %v299, %v639
  %v792 = vadd.f32 %v300, %v640
  %v793 = vadd.f32 %v301, %v641
  %v794 = vadd.f32 %v302, %v642
  %v795 = vadd.f32 %v303, %v643
  %v796 = vadd.f32 %v304, %v644
  %v797 = vadd.f32 %v305, %v645
  %v798 = vadd.f32 %v306, %v646
  %v799 = vadd.f32 %v307, %v647
  %v800 = vadd.f32 %v308, %v648
  %v801 = vadd.f32 %v309, %v649
  %v802 = vadd.f32 %v310, %v650
  %v803 = vadd.f32 %v311, %v651
  %v804 = vadd.f32 %v312, %v652
  %v805 = vadd.f32 %v313, %v653
  %v806 = vadd.f32 %v314, %v654
  %v807 = vadd.f32 %v315, %v655
  %v808 = vadd.f32 %v316, %v656
  %v809 = vadd.f32 %v317, %v657
  %v810 = vadd.f32 %v318, %v658
  %v811 = vadd.f32 %v319, %v659
  %v812 = vadd.f32 %v320, %v660
  %v813 = vadd.f32 %v321, %v661
  %v814 = vadd.f32 %v322, %v662
  %v815 = vadd.f32 %v323, %v663
  %v816 = vadd.f32 %v324, %v664
  %v817 = vadd.f32 %v325, %v665
  %v818 = vadd.f32 %v326, %v666
  %v819 = vadd.f32 %v327, %v667
  %v820 = vadd.f32 %v328, %v668
  %v821 = vadd.f32 %v329, %v669
  %v822 = vadd.f32 %v330, %v670
  %v823 = vadd.f32 %v331, %v671
  %v824 = vadd.f32 %v332, %v672
  %v825 = vadd.f32 %v333, %v673
  %v826 = vadd.f32 %v334, %v674
  %v827 = vadd.f32 %v335, %v675
  %v828 = vadd.f32 %v336, %v676
  %v829 = vadd.f32 %v337, %v677
  %v830 = vadd.f32 %v338, %v678
  %v831 = vadd.f32 %v339, %v679
  %v832 = vadd.f32 %v340, %v680
  %v833 = vadd.f32 %v341, %v681
  %v834 = vadd.f32 %v342, %v682
  %v835 = vadd.f32 %v343, %v683
  %v836 = vadd.f32 %v344, %v684
  %v837 = vadd.f32 %v345, %v685
  %v838 = vadd.f32 %v346, %v686
  %v839 = vadd.f32 %v347, %v687
  %v840 = vadd.f32 %v348, %v688
  %v841 = vadd.f32 %v349, %v689
  %v842 = vadd.f32 %v350, %v690
  %v843 = vadd.f32 %v351, %v691
  %v844 = vadd.f32 %v352, %v692
  %v845 = vadd.f32 %v353, %v693
  %v846 = vadd.f32 %v354, %v694
  %v847 = vadd.f32 %v355, %v695
  %v848 = vadd.f32 %v356, %v696
  %v849 = vadd.f32 %v357, %v697
  %v850 = vadd.f32 %v358, %v698
  %v851 = vadd.f32 %v359, %v699
  %v852 = vadd.f32 %v360, %v700
  %v853 = vadd.f32 %v361, %v701
  %v854 = vadd.f32 %v362, %v702
  %v855 = vadd.f32 %v363, %v703
  %v856 = vadd.f32 %v364, %v704
  %v857 = vadd.f32 %v365, %v705
  %v858 = vadd.f32 %v366, %v706
  %v859 = vadd.f32 %v367, %v707
  %v860 = vadd.f32 %v368, %v708
  %v861 = vadd.f32 %v369, %v709
  %v862 = vadd.f32 %v370, %v710
  %v863 = vadd.f32 %v371, %v711
  %v864 = vadd.f32 %v372, %v712
  %v865 = vadd.f32 %v373, %v713
  %v866 = vadd.f32 %v374, %v714
  %v867 = vadd.f32 %v375, %v715
  %v868 = vadd.f32 %v376, %v716
  %v869 = vadd.f32 %v377, %v717
  %v870 = vadd.f32 %v378, %v718
  %v871 = vadd.f32 %v379, %v719
  %v872 = vadd.f32 %v380, %v720
  %v873 = vadd.f32 %v381, %v721
  %v874 = vadd.f32 %v382, %v722
  %v875 = vadd.f32 %v383, %v723
  %v876 = vadd.f32 %v384, %v724
  %v877 = vadd.f32 %v385, %v725
  %v878 = vadd.f32 %v386, %v726
  %v879 = vadd.f32 %v387, %v727
  %v880 = vadd.f32 %v388, %v728
  %v881 = vadd.f32 %v389, %v729
  %v882 = vadd.f32 %v390, %v730
  %v883 = vadd.f32 %v391, %v731
  %v884 = vadd.f32 %v392, %v732
  %v885 = vadd.f32 %v393, %v733
  %v886 = vadd.f32 %v394, %v734
  %v887 = vadd.f32 %v395, %v735
  %v888 = vadd.f32 %v396, %v736
  %v889 = vadd.f32 %v397, %v737
  %v890 = vadd.f32 %v398, %v738
  %v891 = vadd.f32 %v399, %v739
  %v892 = vadd.f32 %v400, %v740
  %v893 = vadd.f32 %v401, %v741
  %v894 = vadd.f32 %v402, %v742
  %v895 = vadd.f32 %v403, %v743
  %v896 = vadd.f32 %v404, %v744
  %v897 = vadd.f32 %v405, %v745
  %v898 = vadd.f32 %v406, %v746
  %v899 = vadd.f32 %v407, %v747
  %v900 = vadd.f32 %v408, %v748
  %v901 = vadd.f32 %v409, %v749
  %v902 = vadd.f32 %v410, %v750
  %v903 = vadd.f32 %v411, %v751
  %v904 = vadd.f32 %v412, %v752
  %v905 = vadd.f32 %v413, %v753
  %v906 = vadd.f32 %v414, %v754
  %v907 = vadd.f32 %v415, %v755
  %v908 = vadd.f32 %v416, %v756
  %v909 = vadd.f32 %v417, %v757
  %v910 = vadd.f32 %v418, %v758
  %v911 = vadd.f32 %v419, %v759
  %v912 = vadd.f32 %v420, %v760
  %v913 = vadd.f32 %v421, %v761
  %v914 = vadd.f32 %v422, %v762
  %v915 = vadd.f32 %v423, %v763
  %v916 = vadd.f32 %v424, %v764
  %v917 = vadd.f32 %v425, %v765
  %v918 = vadd.f32 %v426, %v766
  %v919 = vadd.f32 %v427, %v767
  %v920 = vadd.f32 %v428, %v768
  %v921 = vadd.f32 %v429, %v769
  %v922 = vadd.f32 %v430, %v770
  %v923 = vadd.f32 %v431, %v771
  %v924 = vadd.f32 %v432, %v772
  %v925 = vadd.f32 %v433, %v773
  %v926 = vadd.f32 %v434, %v774
  %v927 = vadd.f32 %v435, %v775
  %v928 = vadd.f32 %v436, %v776
  %v929 = vadd.f32 %v437, %v777
  %v930 = vadd.f32 %v438, %v778
  %v931 = vadd.f32 %v439, %v779
  %v932 = vadd.f32 %v440, %v780
  %v933 = vadd.f32 %v441, %v781
  %v934 = vadd.f32 %v442, %v782
  %v935 = vadd.f32 %v443, %v783
  %v936 = vld [vmem:[%s2] sm:$0xf]
  %v938 = vlaneseq
  %v939 = vshrl.u32 %v938, 7
  %v940 = vsub.s32 0, %v939
  %v941 = vrot.slane %v936, %v940
  %v942 = vlaneseq
  %v943 = vshrl.u32 %v942, 7
  %v944 = vsub.s32 1, %v943
  %v945 = vrot.slane %v936, %v944
  %v946 = vlaneseq
  %v947 = vshrl.u32 %v946, 7
  %v948 = vsub.s32 2, %v947
  %v949 = vrot.slane %v936, %v948
  %v950 = vlaneseq
  %v951 = vshrl.u32 %v950, 7
  %v952 = vsub.s32 3, %v951
  %v953 = vrot.slane %v936, %v952
  %v958 = vadd.f32 %v784, %v941
  %v959 = vadd.f32 %v785, %v945
  %v960 = vadd.f32 %v786, %v949
  %v961 = vadd.f32 %v787, %v953
  %v962 = vadd.f32 %v788, %v941
  %v963 = vadd.f32 %v789, %v945
  %v964 = vadd.f32 %v790, %v949
  %v965 = vadd.f32 %v791, %v953
  %v966 = vadd.f32 %v792, %v941
  %v967 = vadd.f32 %v793, %v945
  %v968 = vadd.f32 %v794, %v949
  %v969 = vadd.f32 %v795, %v953
  %v970 = vadd.f32 %v796, %v941
  %v971 = vadd.f32 %v797, %v945
  %v972 = vadd.f32 %v798, %v949
  %v973 = vadd.f32 %v799, %v953
  %v974 = vadd.f32 %v800, %v941
  %v975 = vadd.f32 %v801, %v945
  %v976 = vadd.f32 %v802, %v949
  %v977 = vadd.f32 %v803, %v953
  %v978 = vadd.f32 %v804, %v941
  %v979 = vadd.f32 %v805, %v945
  %v980 = vadd.f32 %v806, %v949
  %v981 = vadd.f32 %v807, %v953
  %v982 = vadd.f32 %v808, %v941
  %v983 = vadd.f32 %v809, %v945
  %v984 = vadd.f32 %v810, %v949
  %v985 = vadd.f32 %v811, %v953
  %v986 = vadd.f32 %v812, %v941
  %v987 = vadd.f32 %v813, %v945
  %v988 = vadd.f32 %v814, %v949
  %v989 = vadd.f32 %v815, %v953
  %v990 = vadd.f32 %v816, %v941
  %v991 = vadd.f32 %v817, %v945
  %v992 = vadd.f32 %v818, %v949
  %v993 = vadd.f32 %v819, %v953
  %v994 = vadd.f32 %v820, %v941
  %v995 = vadd.f32 %v821, %v945
  %v996 = vadd.f32 %v822, %v949
  %v997 = vadd.f32 %v823, %v953
  %v998 = vadd.f32 %v824, %v941
  %v999 = vadd.f32 %v825, %v945
  %v1000 = vadd.f32 %v826, %v949
  %v1001 = vadd.f32 %v827, %v953
  %v1002 = vadd.f32 %v828, %v941
  %v1003 = vadd.f32 %v829, %v945
  %v1004 = vadd.f32 %v830, %v949
  %v1005 = vadd.f32 %v831, %v953
  %v1006 = vadd.f32 %v832, %v941
  %v1007 = vadd.f32 %v833, %v945
  %v1008 = vadd.f32 %v834, %v949
  %v1009 = vadd.f32 %v835, %v953
  %v1010 = vadd.f32 %v836, %v941
  %v1011 = vadd.f32 %v837, %v945
  %v1012 = vadd.f32 %v838, %v949
  %v1013 = vadd.f32 %v839, %v953
  %v1014 = vadd.f32 %v840, %v941
  %v1015 = vadd.f32 %v841, %v945
  %v1016 = vadd.f32 %v842, %v949
  %v1017 = vadd.f32 %v843, %v953
  %v1018 = vadd.f32 %v844, %v941
  %v1019 = vadd.f32 %v845, %v945
  %v1020 = vadd.f32 %v846, %v949
  %v1021 = vadd.f32 %v847, %v953
  %v1022 = vadd.f32 %v848, %v941
  %v1023 = vadd.f32 %v849, %v945
  %v1024 = vadd.f32 %v850, %v949
  %v1025 = vadd.f32 %v851, %v953
  %v1026 = vadd.f32 %v852, %v941
  %v1027 = vadd.f32 %v853, %v945
  %v1028 = vadd.f32 %v854, %v949
  %v1029 = vadd.f32 %v855, %v953
  %v1030 = vadd.f32 %v856, %v941
  %v1031 = vadd.f32 %v857, %v945
  %v1032 = vadd.f32 %v858, %v949
  %v1033 = vadd.f32 %v859, %v953
  %v1034 = vadd.f32 %v860, %v941
  %v1035 = vadd.f32 %v861, %v945
  %v1036 = vadd.f32 %v862, %v949
  %v1037 = vadd.f32 %v863, %v953
  %v1038 = vadd.f32 %v864, %v941
  %v1039 = vadd.f32 %v865, %v945
  %v1040 = vadd.f32 %v866, %v949
  %v1041 = vadd.f32 %v867, %v953
  %v1042 = vadd.f32 %v868, %v941
  %v1043 = vadd.f32 %v869, %v945
  %v1044 = vadd.f32 %v870, %v949
  %v1045 = vadd.f32 %v871, %v953
  %v1046 = vadd.f32 %v872, %v941
  %v1047 = vadd.f32 %v873, %v945
  %v1048 = vadd.f32 %v874, %v949
  %v1049 = vadd.f32 %v875, %v953
  %v1050 = vadd.f32 %v876, %v941
  %v1051 = vadd.f32 %v877, %v945
  %v1052 = vadd.f32 %v878, %v949
  %v1053 = vadd.f32 %v879, %v953
  %v1054 = vadd.f32 %v880, %v941
  %v1055 = vadd.f32 %v881, %v945
  %v1056 = vadd.f32 %v882, %v949
  %v1057 = vadd.f32 %v883, %v953
  %v1058 = vadd.f32 %v884, %v941
  %v1059 = vadd.f32 %v885, %v945
  %v1060 = vadd.f32 %v886, %v949
  %v1061 = vadd.f32 %v887, %v953
  %v1062 = vadd.f32 %v888, %v941
  %v1063 = vadd.f32 %v889, %v945
  %v1064 = vadd.f32 %v890, %v949
  %v1065 = vadd.f32 %v891, %v953
  %v1066 = vadd.f32 %v892, %v941
  %v1067 = vadd.f32 %v893, %v945
  %v1068 = vadd.f32 %v894, %v949
  %v1069 = vadd.f32 %v895, %v953
  %v1070 = vadd.f32 %v896, %v941
  %v1071 = vadd.f32 %v897, %v945
  %v1072 = vadd.f32 %v898, %v949
  %v1073 = vadd.f32 %v899, %v953
  %v1074 = vadd.f32 %v900, %v941
  %v1075 = vadd.f32 %v901, %v945
  %v1076 = vadd.f32 %v902, %v949
  %v1077 = vadd.f32 %v903, %v953
  %v1078 = vadd.f32 %v904, %v941
  %v1079 = vadd.f32 %v905, %v945
  %v1080 = vadd.f32 %v906, %v949
  %v1081 = vadd.f32 %v907, %v953
  %v1082 = vadd.f32 %v908, %v941
  %v1083 = vadd.f32 %v909, %v945
  %v1084 = vadd.f32 %v910, %v949
  %v1085 = vadd.f32 %v911, %v953
  %v1086 = vadd.f32 %v912, %v941
  %v1087 = vadd.f32 %v913, %v945
  %v1088 = vadd.f32 %v914, %v949
  %v1089 = vadd.f32 %v915, %v953
  %v1090 = vadd.f32 %v916, %v941
  %v1091 = vadd.f32 %v917, %v945
  %v1092 = vadd.f32 %v918, %v949
  %v1093 = vadd.f32 %v919, %v953
  %v1094 = vadd.f32 %v920, %v941
  %v1095 = vadd.f32 %v921, %v945
  %v1096 = vadd.f32 %v922, %v949
  %v1097 = vadd.f32 %v923, %v953
  %v1098 = vadd.f32 %v924, %v941
  %v1099 = vadd.f32 %v925, %v945
  %v1100 = vadd.f32 %v926, %v949
  %v1101 = vadd.f32 %v927, %v953
  %v1102 = vadd.f32 %v928, %v941
  %v1103 = vadd.f32 %v929, %v945
  %v1104 = vadd.f32 %v930, %v949
  %v1105 = vadd.f32 %v931, %v953
  %v1106 = vadd.f32 %v932, %v941
  %v1107 = vadd.f32 %v933, %v945
  %v1108 = vadd.f32 %v934, %v949
  %v1109 = vadd.f32 %v935, %v953
  %v1110 = vmax.f32 %v958, 0.0
  %v1111 = vmax.f32 %v959, 0.0
  %v1112 = vmax.f32 %v960, 0.0
  %v1113 = vmax.f32 %v961, 0.0
  %v1114 = vmax.f32 %v962, 0.0
  %v1115 = vmax.f32 %v963, 0.0
  %v1116 = vmax.f32 %v964, 0.0
  %v1117 = vmax.f32 %v965, 0.0
  %v1118 = vmax.f32 %v966, 0.0
  %v1119 = vmax.f32 %v967, 0.0
  %v1120 = vmax.f32 %v968, 0.0
  %v1121 = vmax.f32 %v969, 0.0
  %v1122 = vmax.f32 %v970, 0.0
  %v1123 = vmax.f32 %v971, 0.0
  %v1124 = vmax.f32 %v972, 0.0
  %v1125 = vmax.f32 %v973, 0.0
  %v1126 = vmax.f32 %v974, 0.0
  %v1127 = vmax.f32 %v975, 0.0
  %v1128 = vmax.f32 %v976, 0.0
  %v1129 = vmax.f32 %v977, 0.0
  %v1130 = vmax.f32 %v978, 0.0
  %v1131 = vmax.f32 %v979, 0.0
  %v1132 = vmax.f32 %v980, 0.0
  %v1133 = vmax.f32 %v981, 0.0
  %v1134 = vmax.f32 %v982, 0.0
  %v1135 = vmax.f32 %v983, 0.0
  %v1136 = vmax.f32 %v984, 0.0
  %v1137 = vmax.f32 %v985, 0.0
  %v1138 = vmax.f32 %v986, 0.0
  %v1139 = vmax.f32 %v987, 0.0
  %v1140 = vmax.f32 %v988, 0.0
  %v1141 = vmax.f32 %v989, 0.0
  %v1142 = vmax.f32 %v990, 0.0
  %v1143 = vmax.f32 %v991, 0.0
  %v1144 = vmax.f32 %v992, 0.0
  %v1145 = vmax.f32 %v993, 0.0
  %v1146 = vmax.f32 %v994, 0.0
  %v1147 = vmax.f32 %v995, 0.0
  %v1148 = vmax.f32 %v996, 0.0
  %v1149 = vmax.f32 %v997, 0.0
  %v1150 = vmax.f32 %v998, 0.0
  %v1151 = vmax.f32 %v999, 0.0
  %v1152 = vmax.f32 %v1000, 0.0
  %v1153 = vmax.f32 %v1001, 0.0
  %v1154 = vmax.f32 %v1002, 0.0
  %v1155 = vmax.f32 %v1003, 0.0
  %v1156 = vmax.f32 %v1004, 0.0
  %v1157 = vmax.f32 %v1005, 0.0
  %v1158 = vmax.f32 %v1006, 0.0
  %v1159 = vmax.f32 %v1007, 0.0
  %v1160 = vmax.f32 %v1008, 0.0
  %v1161 = vmax.f32 %v1009, 0.0
  %v1162 = vmax.f32 %v1010, 0.0
  %v1163 = vmax.f32 %v1011, 0.0
  %v1164 = vmax.f32 %v1012, 0.0
  %v1165 = vmax.f32 %v1013, 0.0
  %v1166 = vmax.f32 %v1014, 0.0
  %v1167 = vmax.f32 %v1015, 0.0
  %v1168 = vmax.f32 %v1016, 0.0
  %v1169 = vmax.f32 %v1017, 0.0
  %v1170 = vmax.f32 %v1018, 0.0
  %v1171 = vmax.f32 %v1019, 0.0
  %v1172 = vmax.f32 %v1020, 0.0
  %v1173 = vmax.f32 %v1021, 0.0
  %v1174 = vmax.f32 %v1022, 0.0
  %v1175 = vmax.f32 %v1023, 0.0
  %v1176 = vmax.f32 %v1024, 0.0
  %v1177 = vmax.f32 %v1025, 0.0
  %v1178 = vmax.f32 %v1026, 0.0
  %v1179 = vmax.f32 %v1027, 0.0
  %v1180 = vmax.f32 %v1028, 0.0
  %v1181 = vmax.f32 %v1029, 0.0
  %v1182 = vmax.f32 %v1030, 0.0
  %v1183 = vmax.f32 %v1031, 0.0
  %v1184 = vmax.f32 %v1032, 0.0
  %v1185 = vmax.f32 %v1033, 0.0
  %v1186 = vmax.f32 %v1034, 0.0
  %v1187 = vmax.f32 %v1035, 0.0
  %v1188 = vmax.f32 %v1036, 0.0
  %v1189 = vmax.f32 %v1037, 0.0
  %v1190 = vmax.f32 %v1038, 0.0
  %v1191 = vmax.f32 %v1039, 0.0
  %v1192 = vmax.f32 %v1040, 0.0
  %v1193 = vmax.f32 %v1041, 0.0
  %v1194 = vmax.f32 %v1042, 0.0
  %v1195 = vmax.f32 %v1043, 0.0
  %v1196 = vmax.f32 %v1044, 0.0
  %v1197 = vmax.f32 %v1045, 0.0
  %v1198 = vmax.f32 %v1046, 0.0
  %v1199 = vmax.f32 %v1047, 0.0
  %v1200 = vmax.f32 %v1048, 0.0
  %v1201 = vmax.f32 %v1049, 0.0
  %v1202 = vmax.f32 %v1050, 0.0
  %v1203 = vmax.f32 %v1051, 0.0
  %v1204 = vmax.f32 %v1052, 0.0
  %v1205 = vmax.f32 %v1053, 0.0
  %v1206 = vmax.f32 %v1054, 0.0
  %v1207 = vmax.f32 %v1055, 0.0
  %v1208 = vmax.f32 %v1056, 0.0
  %v1209 = vmax.f32 %v1057, 0.0
  %v1210 = vmax.f32 %v1058, 0.0
  %v1211 = vmax.f32 %v1059, 0.0
  %v1212 = vmax.f32 %v1060, 0.0
  %v1213 = vmax.f32 %v1061, 0.0
  %v1214 = vmax.f32 %v1062, 0.0
  %v1215 = vmax.f32 %v1063, 0.0
  %v1216 = vmax.f32 %v1064, 0.0
  %v1217 = vmax.f32 %v1065, 0.0
  %v1218 = vmax.f32 %v1066, 0.0
  %v1219 = vmax.f32 %v1067, 0.0
  %v1220 = vmax.f32 %v1068, 0.0
  %v1221 = vmax.f32 %v1069, 0.0
  %v1222 = vmax.f32 %v1070, 0.0
  %v1223 = vmax.f32 %v1071, 0.0
  %v1224 = vmax.f32 %v1072, 0.0
  %v1225 = vmax.f32 %v1073, 0.0
  %v1226 = vmax.f32 %v1074, 0.0
  %v1227 = vmax.f32 %v1075, 0.0
  %v1228 = vmax.f32 %v1076, 0.0
  %v1229 = vmax.f32 %v1077, 0.0
  %v1230 = vmax.f32 %v1078, 0.0
  %v1231 = vmax.f32 %v1079, 0.0
  %v1232 = vmax.f32 %v1080, 0.0
  %v1233 = vmax.f32 %v1081, 0.0
  %v1234 = vmax.f32 %v1082, 0.0
  %v1235 = vmax.f32 %v1083, 0.0
  %v1236 = vmax.f32 %v1084, 0.0
  %v1237 = vmax.f32 %v1085, 0.0
  %v1238 = vmax.f32 %v1086, 0.0
  %v1239 = vmax.f32 %v1087, 0.0
  %v1240 = vmax.f32 %v1088, 0.0
  %v1241 = vmax.f32 %v1089, 0.0
  %v1242 = vmax.f32 %v1090, 0.0
  %v1243 = vmax.f32 %v1091, 0.0
  %v1244 = vmax.f32 %v1092, 0.0
  %v1245 = vmax.f32 %v1093, 0.0
  %v1246 = vmax.f32 %v1094, 0.0
  %v1247 = vmax.f32 %v1095, 0.0
  %v1248 = vmax.f32 %v1096, 0.0
  %v1249 = vmax.f32 %v1097, 0.0
  %v1250 = vmax.f32 %v1098, 0.0
  %v1251 = vmax.f32 %v1099, 0.0
  %v1252 = vmax.f32 %v1100, 0.0
  %v1253 = vmax.f32 %v1101, 0.0
  %v1254 = vmax.f32 %v1102, 0.0
  %v1255 = vmax.f32 %v1103, 0.0
  %v1256 = vmax.f32 %v1104, 0.0
  %v1257 = vmax.f32 %v1105, 0.0
  %v1258 = vmax.f32 %v1106, 0.0
  %v1259 = vmax.f32 %v1107, 0.0
  %v1260 = vmax.f32 %v1108, 0.0
  %v1261 = vmax.f32 %v1109, 0.0
  %v1262 = vld [vmem:[%s3] sm:$0xff]
  %v1263 = vld [vmem:[%s3 + $0x8] sm:$0xff]
  %v1264 = vld [vmem:[%s3 + $0x10] sm:$0xff]
  %v1265 = vld [vmem:[%s3 + $0x18] sm:$0xff]
  %v1266 = vld [vmem:[%s3 + $0x20] sm:$0xff]
  %v1267 = vld [vmem:[%s3 + $0x28] sm:$0xff]
  %v1268 = vld [vmem:[%s3 + $0x30] sm:$0xff]
  %v1269 = vld [vmem:[%s3 + $0x38] sm:$0xff]
  %v1270 = vld [vmem:[%s3 + $0x40] sm:$0xff]
  %v1271 = vld [vmem:[%s3 + $0x48] sm:$0xff]
  %v1272 = vld [vmem:[%s3 + $0x50] sm:$0xff]
  %v1273 = vld [vmem:[%s3 + $0x58] sm:$0xff]
  %v1274 = vld [vmem:[%s3 + $0x60] sm:$0xff]
  %v1275 = vld [vmem:[%s3 + $0x68] sm:$0xff]
  %v1276 = vld [vmem:[%s3 + $0x70] sm:$0xff]
  %v1277 = vld [vmem:[%s3 + $0x78] sm:$0xff]
  %v1278 = vld [vmem:[%s3 + $0x80] sm:$0xff]
  %v1279 = vld [vmem:[%s3 + $0x88] sm:$0xff]
  %v1280 = vld [vmem:[%s3 + $0x90] sm:$0xff]
  %v1281 = vld [vmem:[%s3 + $0x98] sm:$0xff]
  %v1282 = vld [vmem:[%s3 + $0xa0] sm:$0xff]
  %v1283 = vld [vmem:[%s3 + $0xa8] sm:$0xff]
  %v1284 = vld [vmem:[%s3 + $0xb0] sm:$0xff]
  %v1285 = vld [vmem:[%s3 + $0xb8] sm:$0xff]
  %v1286 = vld [vmem:[%s3 + $0xc0] sm:$0xff]
  %v1287 = vld [vmem:[%s3 + $0xc8] sm:$0xff]
  %v1288 = vld [vmem:[%s3 + $0xd0] sm:$0xff]
  %v1289 = vld [vmem:[%s3 + $0xd8] sm:$0xff]
  %v1290 = vld [vmem:[%s3 + $0xe0] sm:$0xff]
  %v1291 = vld [vmem:[%s3 + $0xe8] sm:$0xff]
  %v1292 = vld [vmem:[%s3 + $0xf0] sm:$0xff]
  %v1293 = vld [vmem:[%s3 + $0xf8] sm:$0xff]
  %v1294 = vld [vmem:[%s3 + $0x100] sm:$0xff]
  %v1295 = vld [vmem:[%s3 + $0x108] sm:$0xff]
  %v1296 = vld [vmem:[%s3 + $0x110] sm:$0xff]
  %v1297 = vld [vmem:[%s3 + $0x118] sm:$0xff]
  %v1298 = vld [vmem:[%s3 + $0x120] sm:$0xff]
  %v1299 = vld [vmem:[%s3 + $0x128] sm:$0xff]
  %v1300 = vld [vmem:[%s3 + $0x130] sm:$0xff]
  %v1301 = vld [vmem:[%s3 + $0x138] sm:$0xff]
  %v1302 = vld [vmem:[%s3 + $0x140] sm:$0xff]
  %v1303 = vld [vmem:[%s3 + $0x148] sm:$0xff]
  %v1304 = vld [vmem:[%s3 + $0x150] sm:$0xff]
  %v1305 = vld [vmem:[%s3 + $0x158] sm:$0xff]
  %v1306 = vld [vmem:[%s3 + $0x160] sm:$0xff]
  %v1307 = vld [vmem:[%s3 + $0x168] sm:$0xff]
  %v1308 = vld [vmem:[%s3 + $0x170] sm:$0xff]
  %v1309 = vld [vmem:[%s3 + $0x178] sm:$0xff]
  %v1310 = vld [vmem:[%s3 + $0x180] sm:$0xff]
  %v1311 = vld [vmem:[%s3 + $0x188] sm:$0xff]
  %v1312 = vld [vmem:[%s3 + $0x190] sm:$0xff]
  %v1313 = vld [vmem:[%s3 + $0x198] sm:$0xff]
  %v1314 = vld [vmem:[%s3 + $0x1a0] sm:$0xff]
  %v1315 = vld [vmem:[%s3 + $0x1a8] sm:$0xff]
  %v1316 = vld [vmem:[%s3 + $0x1b0] sm:$0xff]
  %v1317 = vld [vmem:[%s3 + $0x1b8] sm:$0xff]
  %v1318 = vld [vmem:[%s3 + $0x1c0] sm:$0xff]
  %v1319 = vld [vmem:[%s3 + $0x1c8] sm:$0xff]
  %v1320 = vld [vmem:[%s3 + $0x1d0] sm:$0xff]
  %v1321 = vld [vmem:[%s3 + $0x1d8] sm:$0xff]
  %v1322 = vld [vmem:[%s3 + $0x1e0] sm:$0xff]
  %v1323 = vld [vmem:[%s3 + $0x1e8] sm:$0xff]
  %v1324 = vld [vmem:[%s3 + $0x1f0] sm:$0xff]
  %v1325 = vld [vmem:[%s3 + $0x1f8] sm:$0xff]
  %v1326 = vld [vmem:[%s4] sm:$0x1]
  %v1328 = vlaneseq
  %v1329 = vshrl.u32 %v1328, 7
  %v1330 = vsub.s32 0, %v1329
  %v1331 = vrot.slane %v1326, %v1330
  %1333 = vmatprep.subr.mxu0 0.0
  %1334 = vmatpush1.msra.mxu0 %v1277
  %1335 = vmatprep.subr.mxu0 0.0
  %1336 = vmatpush1.msra.mxu0 %v1276
  %1337 = vmatprep.subr.mxu0 0.0
  %1338 = vmatpush1.msra.mxu0 %v1275
  %1339 = vmatprep.subr.mxu0 0.0
  %1340 = vmatpush1.msra.mxu0 %v1274
  %1341 = vmatprep.subr.mxu0 0.0
  %1342 = vmatpush1.msra.mxu0 %v1273
  %1343 = vmatprep.subr.mxu0 0.0
  %1344 = vmatpush1.msra.mxu0 %v1272
  %1345 = vmatprep.subr.mxu0 0.0
  %1346 = vmatpush1.msra.mxu0 %v1271
  %1347 = vmatprep.subr.mxu0 0.0
  %1348 = vmatpush1.msra.mxu0 %v1270
  %1349 = vmatprep.subr.mxu0 0.0
  %1350 = vmatpush1.msra.mxu0 %v1269
  %1351 = vmatprep.subr.mxu0 0.0
  %1352 = vmatpush1.msra.mxu0 %v1268
  %1353 = vmatprep.subr.mxu0 0.0
  %1354 = vmatpush1.msra.mxu0 %v1267
  %1355 = vmatprep.subr.mxu0 0.0
  %1356 = vmatpush1.msra.mxu0 %v1266
  %1357 = vmatprep.subr.mxu0 0.0
  %1358 = vmatpush1.msra.mxu0 %v1265
  %1359 = vmatprep.subr.mxu0 0.0
  %1360 = vmatpush1.msra.mxu0 %v1264
  %1361 = vmatprep.subr.mxu0 0.0
  %1362 = vmatpush1.msra.mxu0 %v1263
  %1363 = vmatprep.subr.mxu0 0.0
  %1364 = vmatpush1.msra.mxu0 %v1262
  %1365 = vmatprep.subr.mxu0 0.0
  %1366 = vmatpush2.msra.mxu0 %v1293
  %1367 = vmatprep.subr.mxu0 0.0
  %1368 = vmatpush2.msra.mxu0 %v1292
  %1369 = vmatprep.subr.mxu0 0.0
  %1370 = vmatpush2.msra.mxu0 %v1291
  %1371 = vmatprep.subr.mxu0 0.0
  %1372 = vmatpush2.msra.mxu0 %v1290
  %1373 = vmatprep.subr.mxu0 0.0
  %1374 = vmatpush2.msra.mxu0 %v1289
  %1375 = vmatprep.subr.mxu0 0.0
  %1376 = vmatpush2.msra.mxu0 %v1288
  %1377 = vmatprep.subr.mxu0 0.0
  %1378 = vmatpush2.msra.mxu0 %v1287
  %1379 = vmatprep.subr.mxu0 0.0
  %1380 = vmatpush2.msra.mxu0 %v1286
  %1381 = vmatprep.subr.mxu0 0.0
  %1382 = vmatpush2.msra.mxu0 %v1285
  %1383 = vmatprep.subr.mxu0 0.0
  %1384 = vmatpush2.msra.mxu0 %v1284
  %1385 = vmatprep.subr.mxu0 0.0
  %1386 = vmatpush2.msra.mxu0 %v1283
  %1387 = vmatprep.subr.mxu0 0.0
  %1388 = vmatpush2.msra.mxu0 %v1282
  %1389 = vmatprep.subr.mxu0 0.0
  %1390 = vmatpush2.msra.mxu0 %v1281
  %1391 = vmatprep.subr.mxu0 0.0
  %1392 = vmatpush2.msra.mxu0 %v1280
  %1393 = vmatprep.subr.mxu0 0.0
  %1394 = vmatpush2.msra.mxu0 %v1279
  %1395 = vmatprep.subr.mxu0 0.0
  %1396 = vmatpush2.msra.mxu0 %v1278
  %1397 = vmatprep.mubr.f32.mxu0 %v1111
  %1398 = vmatmul.mubr.f32.gmra.mxu0 %v1110
  %v1399 = vpop.f32.mrf.mxu0
  %v1400 = vadd.f32 %v1331, %v1399
  %v1401 = vpop.f32.mrf.mxu0
  %1402 = vmatprep.mubr.f32.mxu0 %v1115
  %1403 = vmatmul.mubr.f32.gmra.mxu0 %v1114
  %v1404 = vpop.f32.mrf.mxu0
  %v1405 = vadd.f32 %v1331, %v1404
  %v1406 = vpop.f32.mrf.mxu0
  %1407 = vmatprep.mubr.f32.mxu0 %v1119
  %1408 = vmatmul.mubr.f32.gmra.mxu0 %v1118
  %v1409 = vpop.f32.mrf.mxu0
  %v1410 = vadd.f32 %v1331, %v1409
  %v1411 = vpop.f32.mrf.mxu0
  %1412 = vmatprep.mubr.f32.mxu0 %v1123
  %1413 = vmatmul.mubr.f32.gmra.mxu0 %v1122
  %v1414 = vpop.f32.mrf.mxu0
  %v1415 = vadd.f32 %v1331, %v1414
  %v1416 = vpop.f32.mrf.mxu0
  %1417 = vmatprep.mubr.f32.mxu0 %v1127
  %1418 = vmatmul.mubr.f32.gmra.mxu0 %v1126
  %v1419 = vpop.f32.mrf.mxu0
  %v1420 = vadd.f32 %v1331, %v1419
  %v1421 = vpop.f32.mrf.mxu0
  %1422 = vmatprep.mubr.f32.mxu0 %v1131
  %1423 = vmatmul.mubr.f32.gmra.mxu0 %v1130
  %v1424 = vpop.f32.mrf.mxu0
  %v1425 = vadd.f32 %v1331, %v1424
  %v1426 = vpop.f32.mrf.mxu0
  %1427 = vmatprep.mubr.f32.mxu0 %v1135
  %1428 = vmatmul.mubr.f32.gmra.mxu0 %v1134
  %v1429 = vpop.f32.mrf.mxu0
  %v1430 = vadd.f32 %v1331, %v1429
  %v1431 = vpop.f32.mrf.mxu0
  %1432 = vmatprep.mubr.f32.mxu0 %v1139
  %1433 = vmatmul.mubr.f32.gmra.mxu0 %v1138
  %v1434 = vpop.f32.mrf.mxu0
  %v1435 = vadd.f32 %v1331, %v1434
  %v1436 = vpop.f32.mrf.mxu0
  %1437 = vmatprep.mubr.f32.mxu0 %v1143
  %1438 = vmatmul.mubr.f32.gmra.mxu0 %v1142
  %v1439 = vpop.f32.mrf.mxu0
  %v1440 = vadd.f32 %v1331, %v1439
  %v1441 = vpop.f32.mrf.mxu0
  %1442 = vmatprep.mubr.f32.mxu0 %v1147
  %1443 = vmatmul.mubr.f32.gmra.mxu0 %v1146
  %v1444 = vpop.f32.mrf.mxu0
  %v1445 = vadd.f32 %v1331, %v1444
  %v1446 = vpop.f32.mrf.mxu0
  %1447 = vmatprep.mubr.f32.mxu0 %v1151
  %1448 = vmatmul.mubr.f32.gmra.mxu0 %v1150
  %v1449 = vpop.f32.mrf.mxu0
  %v1450 = vadd.f32 %v1331, %v1449
  %v1451 = vpop.f32.mrf.mxu0
  %1452 = vmatprep.mubr.f32.mxu0 %v1155
  %1453 = vmatmul.mubr.f32.gmra.mxu0 %v1154
  %v1454 = vpop.f32.mrf.mxu0
  %v1455 = vadd.f32 %v1331, %v1454
  %v1456 = vpop.f32.mrf.mxu0
  %1457 = vmatprep.mubr.f32.mxu0 %v1159
  %1458 = vmatmul.mubr.f32.gmra.mxu0 %v1158
  %v1459 = vpop.f32.mrf.mxu0
  %v1460 = vadd.f32 %v1331, %v1459
  %v1461 = vpop.f32.mrf.mxu0
  %1462 = vmatprep.mubr.f32.mxu0 %v1163
  %1463 = vmatmul.mubr.f32.gmra.mxu0 %v1162
  %v1464 = vpop.f32.mrf.mxu0
  %v1465 = vadd.f32 %v1331, %v1464
  %v1466 = vpop.f32.mrf.mxu0
  %1467 = vmatprep.mubr.f32.mxu0 %v1167
  %1468 = vmatmul.mubr.f32.gmra.mxu0 %v1166
  %v1469 = vpop.f32.mrf.mxu0
  %v1470 = vadd.f32 %v1331, %v1469
  %v1471 = vpop.f32.mrf.mxu0
  %1472 = vmatprep.mubr.f32.mxu0 %v1171
  %1473 = vmatmul.mubr.f32.gmra.mxu0 %v1170
  %v1474 = vpop.f32.mrf.mxu0
  %v1475 = vadd.f32 %v1331, %v1474
  %v1476 = vpop.f32.mrf.mxu0
  %1477 = vmatprep.mubr.f32.mxu0 %v1175
  %1478 = vmatmul.mubr.f32.gmra.mxu0 %v1174
  %v1479 = vpop.f32.mrf.mxu0
  %v1480 = vadd.f32 %v1331, %v1479
  %v1481 = vpop.f32.mrf.mxu0
  %1482 = vmatprep.mubr.f32.mxu0 %v1179
  %1483 = vmatmul.mubr.f32.gmra.mxu0 %v1178
  %v1484 = vpop.f32.mrf.mxu0
  %v1485 = vadd.f32 %v1331, %v1484
  %v1486 = vpop.f32.mrf.mxu0
  %1487 = vmatprep.mubr.f32.mxu0 %v1183
  %1488 = vmatmul.mubr.f32.gmra.mxu0 %v1182
  %v1489 = vpop.f32.mrf.mxu0
  %v1490 = vadd.f32 %v1331, %v1489
  %v1491 = vpop.f32.mrf.mxu0
  %1492 = vmatprep.mubr.f32.mxu0 %v1187
  %1493 = vmatmul.mubr.f32.gmra.mxu0 %v1186
  %v1494 = vpop.f32.mrf.mxu0
  %v1495 = vadd.f32 %v1331, %v1494
  %v1496 = vpop.f32.mrf.mxu0
  %1497 = vmatprep.mubr.f32.mxu0 %v1191
  %1498 = vmatmul.mubr.f32.gmra.mxu0 %v1190
  %v1499 = vpop.f32.mrf.mxu0
  %v1500 = vadd.f32 %v1331, %v1499
  %v1501 = vpop.f32.mrf.mxu0
  %1502 = vmatprep.mubr.f32.mxu0 %v1195
  %1503 = vmatmul.mubr.f32.gmra.mxu0 %v1194
  %v1504 = vpop.f32.mrf.mxu0
  %v1505 = vadd.f32 %v1331, %v1504
  %v1506 = vpop.f32.mrf.mxu0
  %1507 = vmatprep.mubr.f32.mxu0 %v1199
  %1508 = vmatmul.mubr.f32.gmra.mxu0 %v1198
  %v1509 = vpop.f32.mrf.mxu0
  %v1510 = vadd.f32 %v1331, %v1509
  %v1511 = vpop.f32.mrf.mxu0
  %1512 = vmatprep.mubr.f32.mxu0 %v1203
  %1513 = vmatmul.mubr.f32.gmra.mxu0 %v1202
  %v1514 = vpop.f32.mrf.mxu0
  %v1515 = vadd.f32 %v1331, %v1514
  %v1516 = vpop.f32.mrf.mxu0
  %1517 = vmatprep.mubr.f32.mxu0 %v1207
  %1518 = vmatmul.mubr.f32.gmra.mxu0 %v1206
  %v1519 = vpop.f32.mrf.mxu0
  %v1520 = vadd.f32 %v1331, %v1519
  %v1521 = vpop.f32.mrf.mxu0
  %1522 = vmatprep.mubr.f32.mxu0 %v1211
  %1523 = vmatmul.mubr.f32.gmra.mxu0 %v1210
  %v1524 = vpop.f32.mrf.mxu0
  %v1525 = vadd.f32 %v1331, %v1524
  %v1526 = vpop.f32.mrf.mxu0
  %1527 = vmatprep.mubr.f32.mxu0 %v1215
  %1528 = vmatmul.mubr.f32.gmra.mxu0 %v1214
  %v1529 = vpop.f32.mrf.mxu0
  %v1530 = vadd.f32 %v1331, %v1529
  %v1531 = vpop.f32.mrf.mxu0
  %1532 = vmatprep.mubr.f32.mxu0 %v1219
  %1533 = vmatmul.mubr.f32.gmra.mxu0 %v1218
  %v1534 = vpop.f32.mrf.mxu0
  %v1535 = vadd.f32 %v1331, %v1534
  %v1536 = vpop.f32.mrf.mxu0
  %1537 = vmatprep.mubr.f32.mxu0 %v1223
  %1538 = vmatmul.mubr.f32.gmra.mxu0 %v1222
  %v1539 = vpop.f32.mrf.mxu0
  %v1540 = vadd.f32 %v1331, %v1539
  %v1541 = vpop.f32.mrf.mxu0
  %1542 = vmatprep.mubr.f32.mxu0 %v1227
  %1543 = vmatmul.mubr.f32.gmra.mxu0 %v1226
  %v1544 = vpop.f32.mrf.mxu0
  %v1545 = vadd.f32 %v1331, %v1544
  %v1546 = vpop.f32.mrf.mxu0
  %1547 = vmatprep.mubr.f32.mxu0 %v1231
  %1548 = vmatmul.mubr.f32.gmra.mxu0 %v1230
  %v1549 = vpop.f32.mrf.mxu0
  %v1550 = vadd.f32 %v1331, %v1549
  %v1551 = vpop.f32.mrf.mxu0
  %1552 = vmatprep.mubr.f32.mxu0 %v1235
  %1553 = vmatmul.mubr.f32.gmra.mxu0 %v1234
  %v1554 = vpop.f32.mrf.mxu0
  %v1555 = vadd.f32 %v1331, %v1554
  %v1556 = vpop.f32.mrf.mxu0
  %1557 = vmatprep.mubr.f32.mxu0 %v1239
  %1558 = vmatmul.mubr.f32.gmra.mxu0 %v1238
  %v1559 = vpop.f32.mrf.mxu0
  %v1560 = vadd.f32 %v1331, %v1559
  %v1561 = vpop.f32.mrf.mxu0
  %1562 = vmatprep.mubr.f32.mxu0 %v1243
  %1563 = vmatmul.mubr.f32.gmra.mxu0 %v1242
  %v1564 = vpop.f32.mrf.mxu0
  %v1565 = vadd.f32 %v1331, %v1564
  %v1566 = vpop.f32.mrf.mxu0
  %1567 = vmatprep.mubr.f32.mxu0 %v1247
  %1568 = vmatmul.mubr.f32.gmra.mxu0 %v1246
  %v1569 = vpop.f32.mrf.mxu0
  %v1570 = vadd.f32 %v1331, %v1569
  %v1571 = vpop.f32.mrf.mxu0
  %1572 = vmatprep.mubr.f32.mxu0 %v1251
  %1573 = vmatmul.mubr.f32.gmra.mxu0 %v1250
  %v1574 = vpop.f32.mrf.mxu0
  %v1575 = vadd.f32 %v1331, %v1574
  %v1576 = vpop.f32.mrf.mxu0
  %1577 = vmatprep.mubr.f32.mxu0 %v1255
  %1578 = vmatmul.mubr.f32.gmra.mxu0 %v1254
  %v1579 = vpop.f32.mrf.mxu0
  %v1580 = vadd.f32 %v1331, %v1579
  %v1581 = vpop.f32.mrf.mxu0
  %1582 = vmatprep.mubr.f32.mxu0 %v1259
  %1583 = vmatmul.mubr.f32.gmra.mxu0 %v1258
  %v1584 = vpop.f32.mrf.mxu0
  %v1585 = vadd.f32 %v1331, %v1584
  %v1586 = vpop.f32.mrf.mxu0
  %1587 = vdwg.mxu0
  %1588 = vmatprep.subr.mxu0 0.0
  %1589 = vmatpush1.msra.mxu0 %v1309
  %1590 = vmatprep.subr.mxu0 0.0
  %1591 = vmatpush1.msra.mxu0 %v1308
  %1592 = vmatprep.subr.mxu0 0.0
  %1593 = vmatpush1.msra.mxu0 %v1307
  %1594 = vmatprep.subr.mxu0 0.0
  %1595 = vmatpush1.msra.mxu0 %v1306
  %1596 = vmatprep.subr.mxu0 0.0
  %1597 = vmatpush1.msra.mxu0 %v1305
  %1598 = vmatprep.subr.mxu0 0.0
  %1599 = vmatpush1.msra.mxu0 %v1304
  %1600 = vmatprep.subr.mxu0 0.0
  %1601 = vmatpush1.msra.mxu0 %v1303
  %1602 = vmatprep.subr.mxu0 0.0
  %1603 = vmatpush1.msra.mxu0 %v1302
  %1604 = vmatprep.subr.mxu0 0.0
  %1605 = vmatpush1.msra.mxu0 %v1301
  %1606 = vmatprep.subr.mxu0 0.0
  %1607 = vmatpush1.msra.mxu0 %v1300
  %1608 = vmatprep.subr.mxu0 0.0
  %1609 = vmatpush1.msra.mxu0 %v1299
  %1610 = vmatprep.subr.mxu0 0.0
  %1611 = vmatpush1.msra.mxu0 %v1298
  %1612 = vmatprep.subr.mxu0 0.0
  %1613 = vmatpush1.msra.mxu0 %v1297
  %1614 = vmatprep.subr.mxu0 0.0
  %1615 = vmatpush1.msra.mxu0 %v1296
  %1616 = vmatprep.subr.mxu0 0.0
  %1617 = vmatpush1.msra.mxu0 %v1295
  %1618 = vmatprep.subr.mxu0 0.0
  %1619 = vmatpush1.msra.mxu0 %v1294
  %1620 = vmatprep.subr.mxu0 0.0
  %1621 = vmatpush2.msra.mxu0 %v1325
  %1622 = vmatprep.subr.mxu0 0.0
  %1623 = vmatpush2.msra.mxu0 %v1324
  %1624 = vmatprep.subr.mxu0 0.0
  %1625 = vmatpush2.msra.mxu0 %v1323
  %1626 = vmatprep.subr.mxu0 0.0
  %1627 = vmatpush2.msra.mxu0 %v1322
  %1628 = vmatprep.subr.mxu0 0.0
  %1629 = vmatpush2.msra.mxu0 %v1321
  %1630 = vmatprep.subr.mxu0 0.0
  %1631 = vmatpush2.msra.mxu0 %v1320
  %1632 = vmatprep.subr.mxu0 0.0
  %1633 = vmatpush2.msra.mxu0 %v1319
  %1634 = vmatprep.subr.mxu0 0.0
  %1635 = vmatpush2.msra.mxu0 %v1318
  %1636 = vmatprep.subr.mxu0 0.0
  %1637 = vmatpush2.msra.mxu0 %v1317
  %1638 = vmatprep.subr.mxu0 0.0
  %1639 = vmatpush2.msra.mxu0 %v1316
  %1640 = vmatprep.subr.mxu0 0.0
  %1641 = vmatpush2.msra.mxu0 %v1315
  %1642 = vmatprep.subr.mxu0 0.0
  %1643 = vmatpush2.msra.mxu0 %v1314
  %1644 = vmatprep.subr.mxu0 0.0
  %1645 = vmatpush2.msra.mxu0 %v1313
  %1646 = vmatprep.subr.mxu0 0.0
  %1647 = vmatpush2.msra.mxu0 %v1312
  %1648 = vmatprep.subr.mxu0 0.0
  %1649 = vmatpush2.msra.mxu0 %v1311
  %1650 = vmatprep.subr.mxu0 0.0
  %1651 = vmatpush2.msra.mxu0 %v1310
  %1652 = vmatprep.mubr.f32.mxu0 %v1113
  %1653 = vmatmul.mubr.f32.gmra.mxu0 %v1112
  %v1654 = vpop.f32.mrf.mxu0
  %v1655 = vadd.f32 %v1400, %v1654
  %v1656 = vpop.f32.mrf.mxu0
  %1657 = vmatprep.mubr.f32.mxu0 %v1117
  %1658 = vmatmul.mubr.f32.gmra.mxu0 %v1116
  %v1659 = vpop.f32.mrf.mxu0
  %v1660 = vadd.f32 %v1405, %v1659
  %v1661 = vpop.f32.mrf.mxu0
  %1662 = vmatprep.mubr.f32.mxu0 %v1121
  %1663 = vmatmul.mubr.f32.gmra.mxu0 %v1120
  %v1664 = vpop.f32.mrf.mxu0
  %v1665 = vadd.f32 %v1410, %v1664
  %v1666 = vpop.f32.mrf.mxu0
  %1667 = vmatprep.mubr.f32.mxu0 %v1125
  %1668 = vmatmul.mubr.f32.gmra.mxu0 %v1124
  %v1669 = vpop.f32.mrf.mxu0
  %v1670 = vadd.f32 %v1415, %v1669
  %v1671 = vpop.f32.mrf.mxu0
  %1672 = vmatprep.mubr.f32.mxu0 %v1129
  %1673 = vmatmul.mubr.f32.gmra.mxu0 %v1128
  %v1674 = vpop.f32.mrf.mxu0
  %v1675 = vadd.f32 %v1420, %v1674
  %v1676 = vpop.f32.mrf.mxu0
  %1677 = vmatprep.mubr.f32.mxu0 %v1133
  %1678 = vmatmul.mubr.f32.gmra.mxu0 %v1132
  %v1679 = vpop.f32.mrf.mxu0
  %v1680 = vadd.f32 %v1425, %v1679
  %v1681 = vpop.f32.mrf.mxu0
  %1682 = vmatprep.mubr.f32.mxu0 %v1137
  %1683 = vmatmul.mubr.f32.gmra.mxu0 %v1136
  %v1684 = vpop.f32.mrf.mxu0
  %v1685 = vadd.f32 %v1430, %v1684
  %v1686 = vpop.f32.mrf.mxu0
  %1687 = vmatprep.mubr.f32.mxu0 %v1141
  %1688 = vmatmul.mubr.f32.gmra.mxu0 %v1140
  %v1689 = vpop.f32.mrf.mxu0
  %v1690 = vadd.f32 %v1435, %v1689
  %v1691 = vpop.f32.mrf.mxu0
  %1692 = vmatprep.mubr.f32.mxu0 %v1145
  %1693 = vmatmul.mubr.f32.gmra.mxu0 %v1144
  %v1694 = vpop.f32.mrf.mxu0
  %v1695 = vadd.f32 %v1440, %v1694
  %v1696 = vpop.f32.mrf.mxu0
  %1697 = vmatprep.mubr.f32.mxu0 %v1149
  %1698 = vmatmul.mubr.f32.gmra.mxu0 %v1148
  %v1699 = vpop.f32.mrf.mxu0
  %v1700 = vadd.f32 %v1445, %v1699
  %v1701 = vpop.f32.mrf.mxu0
  %1702 = vmatprep.mubr.f32.mxu0 %v1153
  %1703 = vmatmul.mubr.f32.gmra.mxu0 %v1152
  %v1704 = vpop.f32.mrf.mxu0
  %v1705 = vadd.f32 %v1450, %v1704
  %v1706 = vpop.f32.mrf.mxu0
  %1707 = vmatprep.mubr.f32.mxu0 %v1157
  %1708 = vmatmul.mubr.f32.gmra.mxu0 %v1156
  %v1709 = vpop.f32.mrf.mxu0
  %v1710 = vadd.f32 %v1455, %v1709
  %v1711 = vpop.f32.mrf.mxu0
  %1712 = vmatprep.mubr.f32.mxu0 %v1161
  %1713 = vmatmul.mubr.f32.gmra.mxu0 %v1160
  %v1714 = vpop.f32.mrf.mxu0
  %v1715 = vadd.f32 %v1460, %v1714
  %v1716 = vpop.f32.mrf.mxu0
  %1717 = vmatprep.mubr.f32.mxu0 %v1165
  %1718 = vmatmul.mubr.f32.gmra.mxu0 %v1164
  %v1719 = vpop.f32.mrf.mxu0
  %v1720 = vadd.f32 %v1465, %v1719
  %v1721 = vpop.f32.mrf.mxu0
  %1722 = vmatprep.mubr.f32.mxu0 %v1169
  %1723 = vmatmul.mubr.f32.gmra.mxu0 %v1168
  %v1724 = vpop.f32.mrf.mxu0
  %v1725 = vadd.f32 %v1470, %v1724
  %v1726 = vpop.f32.mrf.mxu0
  %1727 = vmatprep.mubr.f32.mxu0 %v1173
  %1728 = vmatmul.mubr.f32.gmra.mxu0 %v1172
  %v1729 = vpop.f32.mrf.mxu0
  %v1730 = vadd.f32 %v1475, %v1729
  %v1731 = vpop.f32.mrf.mxu0
  %1732 = vmatprep.mubr.f32.mxu0 %v1177
  %1733 = vmatmul.mubr.f32.gmra.mxu0 %v1176
  %v1734 = vpop.f32.mrf.mxu0
  %v1735 = vadd.f32 %v1480, %v1734
  %v1736 = vpop.f32.mrf.mxu0
  %1737 = vmatprep.mubr.f32.mxu0 %v1181
  %1738 = vmatmul.mubr.f32.gmra.mxu0 %v1180
  %v1739 = vpop.f32.mrf.mxu0
  %v1740 = vadd.f32 %v1485, %v1739
  %v1741 = vpop.f32.mrf.mxu0
  %1742 = vmatprep.mubr.f32.mxu0 %v1185
  %1743 = vmatmul.mubr.f32.gmra.mxu0 %v1184
  %v1744 = vpop.f32.mrf.mxu0
  %v1745 = vadd.f32 %v1490, %v1744
  %v1746 = vpop.f32.mrf.mxu0
  %1747 = vmatprep.mubr.f32.mxu0 %v1189
  %1748 = vmatmul.mubr.f32.gmra.mxu0 %v1188
  %v1749 = vpop.f32.mrf.mxu0
  %v1750 = vadd.f32 %v1495, %v1749
  %v1751 = vpop.f32.mrf.mxu0
  %1752 = vmatprep.mubr.f32.mxu0 %v1193
  %1753 = vmatmul.mubr.f32.gmra.mxu0 %v1192
  %v1754 = vpop.f32.mrf.mxu0
  %v1755 = vadd.f32 %v1500, %v1754
  %v1756 = vpop.f32.mrf.mxu0
  %1757 = vmatprep.mubr.f32.mxu0 %v1197
  %1758 = vmatmul.mubr.f32.gmra.mxu0 %v1196
  %v1759 = vpop.f32.mrf.mxu0
  %v1760 = vadd.f32 %v1505, %v1759
  %v1761 = vpop.f32.mrf.mxu0
  %1762 = vmatprep.mubr.f32.mxu0 %v1201
  %1763 = vmatmul.mubr.f32.gmra.mxu0 %v1200
  %v1764 = vpop.f32.mrf.mxu0
  %v1765 = vadd.f32 %v1510, %v1764
  %v1766 = vpop.f32.mrf.mxu0
  %1767 = vmatprep.mubr.f32.mxu0 %v1205
  %1768 = vmatmul.mubr.f32.gmra.mxu0 %v1204
  %v1769 = vpop.f32.mrf.mxu0
  %v1770 = vadd.f32 %v1515, %v1769
  %v1771 = vpop.f32.mrf.mxu0
  %1772 = vmatprep.mubr.f32.mxu0 %v1209
  %1773 = vmatmul.mubr.f32.gmra.mxu0 %v1208
  %v1774 = vpop.f32.mrf.mxu0
  %v1775 = vadd.f32 %v1520, %v1774
  %v1776 = vpop.f32.mrf.mxu0
  %1777 = vmatprep.mubr.f32.mxu0 %v1213
  %1778 = vmatmul.mubr.f32.gmra.mxu0 %v1212
  %v1779 = vpop.f32.mrf.mxu0
  %v1780 = vadd.f32 %v1525, %v1779
  %v1781 = vpop.f32.mrf.mxu0
  %1782 = vmatprep.mubr.f32.mxu0 %v1217
  %1783 = vmatmul.mubr.f32.gmra.mxu0 %v1216
  %v1784 = vpop.f32.mrf.mxu0
  %v1785 = vadd.f32 %v1530, %v1784
  %v1786 = vpop.f32.mrf.mxu0
  %1787 = vmatprep.mubr.f32.mxu0 %v1221
  %1788 = vmatmul.mubr.f32.gmra.mxu0 %v1220
  %v1789 = vpop.f32.mrf.mxu0
  %v1790 = vadd.f32 %v1535, %v1789
  %v1791 = vpop.f32.mrf.mxu0
  %1792 = vmatprep.mubr.f32.mxu0 %v1225
  %1793 = vmatmul.mubr.f32.gmra.mxu0 %v1224
  %v1794 = vpop.f32.mrf.mxu0
  %v1795 = vadd.f32 %v1540, %v1794
  %v1796 = vpop.f32.mrf.mxu0
  %1797 = vmatprep.mubr.f32.mxu0 %v1229
  %1798 = vmatmul.mubr.f32.gmra.mxu0 %v1228
  %v1799 = vpop.f32.mrf.mxu0
  %v1800 = vadd.f32 %v1545, %v1799
  %v1801 = vpop.f32.mrf.mxu0
  %1802 = vmatprep.mubr.f32.mxu0 %v1233
  %1803 = vmatmul.mubr.f32.gmra.mxu0 %v1232
  %v1804 = vpop.f32.mrf.mxu0
  %v1805 = vadd.f32 %v1550, %v1804
  %v1806 = vpop.f32.mrf.mxu0
  %1807 = vmatprep.mubr.f32.mxu0 %v1237
  %1808 = vmatmul.mubr.f32.gmra.mxu0 %v1236
  %v1809 = vpop.f32.mrf.mxu0
  %v1810 = vadd.f32 %v1555, %v1809
  %v1811 = vpop.f32.mrf.mxu0
  %1812 = vmatprep.mubr.f32.mxu0 %v1241
  %1813 = vmatmul.mubr.f32.gmra.mxu0 %v1240
  %v1814 = vpop.f32.mrf.mxu0
  %v1815 = vadd.f32 %v1560, %v1814
  %v1816 = vpop.f32.mrf.mxu0
  %1817 = vmatprep.mubr.f32.mxu0 %v1245
  %1818 = vmatmul.mubr.f32.gmra.mxu0 %v1244
  %v1819 = vpop.f32.mrf.mxu0
  %v1820 = vadd.f32 %v1565, %v1819
  %v1821 = vpop.f32.mrf.mxu0
  %1822 = vmatprep.mubr.f32.mxu0 %v1249
  %1823 = vmatmul.mubr.f32.gmra.mxu0 %v1248
  %v1824 = vpop.f32.mrf.mxu0
  %v1825 = vadd.f32 %v1570, %v1824
  %v1826 = vpop.f32.mrf.mxu0
  %1827 = vmatprep.mubr.f32.mxu0 %v1253
  %1828 = vmatmul.mubr.f32.gmra.mxu0 %v1252
  %v1829 = vpop.f32.mrf.mxu0
  %v1830 = vadd.f32 %v1575, %v1829
  %v1831 = vpop.f32.mrf.mxu0
  %1832 = vmatprep.mubr.f32.mxu0 %v1257
  %1833 = vmatmul.mubr.f32.gmra.mxu0 %v1256
  %v1834 = vpop.f32.mrf.mxu0
  %v1835 = vadd.f32 %v1580, %v1834
  %v1836 = vpop.f32.mrf.mxu0
  %1837 = vmatprep.mubr.f32.mxu0 %v1261
  %1838 = vmatmul.mubr.f32.gmra.mxu0 %v1260
  %v1839 = vpop.f32.mrf.mxu0
  %v1840 = vadd.f32 %v1585, %v1839
  %v1841 = vpop.f32.mrf.mxu0
  %1842 = vdwg.mxu0
  %v1843 = vmax.f32 %v1655, 0.0
  %v1844 = vmax.f32 %v1660, 0.0
  %v1845 = vmax.f32 %v1665, 0.0
  %v1846 = vmax.f32 %v1670, 0.0
  %v1847 = vmax.f32 %v1675, 0.0
  %v1848 = vmax.f32 %v1680, 0.0
  %v1849 = vmax.f32 %v1685, 0.0
  %v1850 = vmax.f32 %v1690, 0.0
  %v1851 = vmax.f32 %v1695, 0.0
  %v1852 = vmax.f32 %v1700, 0.0
  %v1853 = vmax.f32 %v1705, 0.0
  %v1854 = vmax.f32 %v1710, 0.0
  %v1855 = vmax.f32 %v1715, 0.0
  %v1856 = vmax.f32 %v1720, 0.0
  %v1857 = vmax.f32 %v1725, 0.0
  %v1858 = vmax.f32 %v1730, 0.0
  %v1859 = vmax.f32 %v1735, 0.0
  %v1860 = vmax.f32 %v1740, 0.0
  %v1861 = vmax.f32 %v1745, 0.0
  %v1862 = vmax.f32 %v1750, 0.0
  %v1863 = vmax.f32 %v1755, 0.0
  %v1864 = vmax.f32 %v1760, 0.0
  %v1865 = vmax.f32 %v1765, 0.0
  %v1866 = vmax.f32 %v1770, 0.0
  %v1867 = vmax.f32 %v1775, 0.0
  %v1868 = vmax.f32 %v1780, 0.0
  %v1869 = vmax.f32 %v1785, 0.0
  %v1870 = vmax.f32 %v1790, 0.0
  %v1871 = vmax.f32 %v1795, 0.0
  %v1872 = vmax.f32 %v1800, 0.0
  %v1873 = vmax.f32 %v1805, 0.0
  %v1874 = vmax.f32 %v1810, 0.0
  %v1875 = vmax.f32 %v1815, 0.0
  %v1876 = vmax.f32 %v1820, 0.0
  %v1877 = vmax.f32 %v1825, 0.0
  %v1878 = vmax.f32 %v1830, 0.0
  %v1879 = vmax.f32 %v1835, 0.0
  %v1880 = vmax.f32 %v1840, 0.0
  %v1881 = vld [vmem:[%s5] sm:$0xff]
  %v1882 = vld [vmem:[%s5 + $0x8] sm:$0xff]
  %v1883 = vld [vmem:[%s5 + $0x10] sm:$0xff]
  %v1884 = vld [vmem:[%s5 + $0x18] sm:$0xff]
  %v1885 = vld [vmem:[%s5 + $0x20] sm:$0xff]
  %v1886 = vld [vmem:[%s5 + $0x28] sm:$0xff]
  %v1887 = vld [vmem:[%s5 + $0x30] sm:$0xff]
  %v1888 = vld [vmem:[%s5 + $0x38] sm:$0xff]
  %v1889 = vld [vmem:[%s5 + $0x40] sm:$0xff]
  %v1890 = vld [vmem:[%s5 + $0x48] sm:$0xff]
  %v1891 = vld [vmem:[%s5 + $0x50] sm:$0xff]
  %v1892 = vld [vmem:[%s5 + $0x58] sm:$0xff]
  %v1893 = vld [vmem:[%s5 + $0x60] sm:$0xff]
  %v1894 = vld [vmem:[%s5 + $0x68] sm:$0xff]
  %v1895 = vld [vmem:[%s5 + $0x70] sm:$0xff]
  %v1896 = vld [vmem:[%s5 + $0x78] sm:$0xff]
  %v1897 = vld [vmem:[%s6] sm:$0x1]
  %v1899 = vlaneseq
  %v1900 = vshrl.u32 %v1899, 7
  %v1901 = vsub.s32 0, %v1900
  %v1902 = vrot.slane %v1897, %v1901
  %1904 = vmatprep.subr.mxu0 0.0
  %1905 = vmatpush1.msra.mxu0 %v1896
  %1906 = vmatprep.subr.mxu0 0.0
  %1907 = vmatpush1.msra.mxu0 %v1895
  %1908 = vmatprep.subr.mxu0 0.0
  %1909 = vmatpush1.msra.mxu0 %v1894
  %1910 = vmatprep.subr.mxu0 0.0
  %1911 = vmatpush1.msra.mxu0 %v1893
  %1912 = vmatprep.subr.mxu0 0.0
  %1913 = vmatpush1.msra.mxu0 %v1892
  %1914 = vmatprep.subr.mxu0 0.0
  %1915 = vmatpush1.msra.mxu0 %v1891
  %1916 = vmatprep.subr.mxu0 0.0
  %1917 = vmatpush1.msra.mxu0 %v1890
  %1918 = vmatprep.subr.mxu0 0.0
  %1919 = vmatpush1.msra.mxu0 %v1889
  %1920 = vmatprep.subr.mxu0 0.0
  %1921 = vmatpush1.msra.mxu0 %v1888
  %1922 = vmatprep.subr.mxu0 0.0
  %1923 = vmatpush1.msra.mxu0 %v1887
  %1924 = vmatprep.subr.mxu0 0.0
  %1925 = vmatpush1.msra.mxu0 %v1886
  %1926 = vmatprep.subr.mxu0 0.0
  %1927 = vmatpush1.msra.mxu0 %v1885
  %1928 = vmatprep.subr.mxu0 0.0
  %1929 = vmatpush1.msra.mxu0 %v1884
  %1930 = vmatprep.subr.mxu0 0.0
  %1931 = vmatpush1.msra.mxu0 %v1883
  %1932 = vmatprep.subr.mxu0 0.0
  %1933 = vmatpush1.msra.mxu0 %v1882
  %1934 = vmatprep.subr.mxu0 0.0
  %1935 = vmatpush1.msra.mxu0 %v1881
  %1936 = vmatprep.subr.mxu0 0.0
  %1937 = vmatpush2.msra.mxu0 0.0
  %1938 = vmatprep.subr.mxu0 0.0
  %1939 = vmatpush2.msra.mxu0 0.0
  %1940 = vmatprep.subr.mxu0 0.0
  %1941 = vmatpush2.msra.mxu0 0.0
  %1942 = vmatprep.subr.mxu0 0.0
  %1943 = vmatpush2.msra.mxu0 0.0
  %1944 = vmatprep.subr.mxu0 0.0
  %1945 = vmatpush2.msra.mxu0 0.0
  %1946 = vmatprep.subr.mxu0 0.0
  %1947 = vmatpush2.msra.mxu0 0.0
  %1948 = vmatprep.subr.mxu0 0.0
  %1949 = vmatpush2.msra.mxu0 0.0
  %1950 = vmatprep.subr.mxu0 0.0
  %1951 = vmatpush2.msra.mxu0 0.0
  %1952 = vmatprep.subr.mxu0 0.0
  %1953 = vmatpush2.msra.mxu0 0.0
  %1954 = vmatprep.subr.mxu0 0.0
  %1955 = vmatpush2.msra.mxu0 0.0
  %1956 = vmatprep.subr.mxu0 0.0
  %1957 = vmatpush2.msra.mxu0 0.0
  %1958 = vmatprep.subr.mxu0 0.0
  %1959 = vmatpush2.msra.mxu0 0.0
  %1960 = vmatprep.subr.mxu0 0.0
  %1961 = vmatpush2.msra.mxu0 0.0
  %1962 = vmatprep.subr.mxu0 0.0
  %1963 = vmatpush2.msra.mxu0 0.0
  %1964 = vmatprep.subr.mxu0 0.0
  %1965 = vmatpush2.msra.mxu0 0.0
  %1966 = vmatprep.subr.mxu0 0.0
  %1967 = vmatpush2.msra.mxu0 0.0
  %1968 = vmatprep.mubr.f32.mxu0 0.0
  %1969 = vmatmul.mubr.f32.gmra.mxu0 %v1843
  %v1970 = vpop.f32.mrf.mxu0
  %v1971 = vadd.f32 %v1902, %v1970
  %v1972 = vpop.f32.mrf.mxu0
  %1973 = vmatprep.mubr.f32.mxu0 0.0
  %1974 = vmatmul.mubr.f32.gmra.mxu0 %v1844
  %v1975 = vpop.f32.mrf.mxu0
  %v1976 = vadd.f32 %v1902, %v1975
  %v1977 = vpop.f32.mrf.mxu0
  %1978 = vmatprep.mubr.f32.mxu0 0.0
  %1979 = vmatmul.mubr.f32.gmra.mxu0 %v1845
  %v1980 = vpop.f32.mrf.mxu0
  %v1981 = vadd.f32 %v1902, %v1980
  %v1982 = vpop.f32.mrf.mxu0
  %1983 = vmatprep.mubr.f32.mxu0 0.0
  %1984 = vmatmul.mubr.f32.gmra.mxu0 %v1846
  %v1985 = vpop.f32.mrf.mxu0
  %v1986 = vadd.f32 %v1902, %v1985
  %v1987 = vpop.f32.mrf.mxu0
  %1988 = vmatprep.mubr.f32.mxu0 0.0
  %1989 = vmatmul.mubr.f32.gmra.mxu0 %v1847
  %v1990 = vpop.f32.mrf.mxu0
  %v1991 = vadd.f32 %v1902, %v1990
  %v1992 = vpop.f32.mrf.mxu0
  %1993 = vmatprep.mubr.f32.mxu0 0.0
  %1994 = vmatmul.mubr.f32.gmra.mxu0 %v1848
  %v1995 = vpop.f32.mrf.mxu0
  %v1996 = vadd.f32 %v1902, %v1995
  %v1997 = vpop.f32.mrf.mxu0
  %1998 = vmatprep.mubr.f32.mxu0 0.0
  %1999 = vmatmul.mubr.f32.gmra.mxu0 %v1849
  %v2000 = vpop.f32.mrf.mxu0
  %v2001 = vadd.f32 %v1902, %v2000
  %v2002 = vpop.f32.mrf.mxu0
  %2003 = vmatprep.mubr.f32.mxu0 0.0
  %2004 = vmatmul.mubr.f32.gmra.mxu0 %v1850
  %v2005 = vpop.f32.mrf.mxu0
  %v2006 = vadd.f32 %v1902, %v2005
  %v2007 = vpop.f32.mrf.mxu0
  %2008 = vmatprep.mubr.f32.mxu0 0.0
  %2009 = vmatmul.mubr.f32.gmra.mxu0 %v1851
  %v2010 = vpop.f32.mrf.mxu0
  %v2011 = vadd.f32 %v1902, %v2010
  %v2012 = vpop.f32.mrf.mxu0
  %2013 = vmatprep.mubr.f32.mxu0 0.0
  %2014 = vmatmul.mubr.f32.gmra.mxu0 %v1852
  %v2015 = vpop.f32.mrf.mxu0
  %v2016 = vadd.f32 %v1902, %v2015
  %v2017 = vpop.f32.mrf.mxu0
  %2018 = vmatprep.mubr.f32.mxu0 0.0
  %2019 = vmatmul.mubr.f32.gmra.mxu0 %v1853
  %v2020 = vpop.f32.mrf.mxu0
  %v2021 = vadd.f32 %v1902, %v2020
  %v2022 = vpop.f32.mrf.mxu0
  %2023 = vmatprep.mubr.f32.mxu0 0.0
  %2024 = vmatmul.mubr.f32.gmra.mxu0 %v1854
  %v2025 = vpop.f32.mrf.mxu0
  %v2026 = vadd.f32 %v1902, %v2025
  %v2027 = vpop.f32.mrf.mxu0
  %2028 = vmatprep.mubr.f32.mxu0 0.0
  %2029 = vmatmul.mubr.f32.gmra.mxu0 %v1855
  %v2030 = vpop.f32.mrf.mxu0
  %v2031 = vadd.f32 %v1902, %v2030
  %v2032 = vpop.f32.mrf.mxu0
  %2033 = vmatprep.mubr.f32.mxu0 0.0
  %2034 = vmatmul.mubr.f32.gmra.mxu0 %v1856
  %v2035 = vpop.f32.mrf.mxu0
  %v2036 = vadd.f32 %v1902, %v2035
  %v2037 = vpop.f32.mrf.mxu0
  %2038 = vmatprep.mubr.f32.mxu0 0.0
  %2039 = vmatmul.mubr.f32.gmra.mxu0 %v1857
  %v2040 = vpop.f32.mrf.mxu0
  %v2041 = vadd.f32 %v1902, %v2040
  %v2042 = vpop.f32.mrf.mxu0
  %2043 = vmatprep.mubr.f32.mxu0 0.0
  %2044 = vmatmul.mubr.f32.gmra.mxu0 %v1858
  %v2045 = vpop.f32.mrf.mxu0
  %v2046 = vadd.f32 %v1902, %v2045
  %v2047 = vpop.f32.mrf.mxu0
  %2048 = vmatprep.mubr.f32.mxu0 0.0
  %2049 = vmatmul.mubr.f32.gmra.mxu0 %v1859
  %v2050 = vpop.f32.mrf.mxu0
  %v2051 = vadd.f32 %v1902, %v2050
  %v2052 = vpop.f32.mrf.mxu0
  %2053 = vmatprep.mubr.f32.mxu0 0.0
  %2054 = vmatmul.mubr.f32.gmra.mxu0 %v1860
  %v2055 = vpop.f32.mrf.mxu0
  %v2056 = vadd.f32 %v1902, %v2055
  %v2057 = vpop.f32.mrf.mxu0
  %2058 = vmatprep.mubr.f32.mxu0 0.0
  %2059 = vmatmul.mubr.f32.gmra.mxu0 %v1861
  %v2060 = vpop.f32.mrf.mxu0
  %v2061 = vadd.f32 %v1902, %v2060
  %v2062 = vpop.f32.mrf.mxu0
  %2063 = vmatprep.mubr.f32.mxu0 0.0
  %2064 = vmatmul.mubr.f32.gmra.mxu0 %v1862
  %v2065 = vpop.f32.mrf.mxu0
  %v2066 = vadd.f32 %v1902, %v2065
  %v2067 = vpop.f32.mrf.mxu0
  %2068 = vmatprep.mubr.f32.mxu0 0.0
  %2069 = vmatmul.mubr.f32.gmra.mxu0 %v1863
  %v2070 = vpop.f32.mrf.mxu0
  %v2071 = vadd.f32 %v1902, %v2070
  %v2072 = vpop.f32.mrf.mxu0
  %2073 = vmatprep.mubr.f32.mxu0 0.0
  %2074 = vmatmul.mubr.f32.gmra.mxu0 %v1864
  %v2075 = vpop.f32.mrf.mxu0
  %v2076 = vadd.f32 %v1902, %v2075
  %v2077 = vpop.f32.mrf.mxu0
  %2078 = vmatprep.mubr.f32.mxu0 0.0
  %2079 = vmatmul.mubr.f32.gmra.mxu0 %v1865
  %v2080 = vpop.f32.mrf.mxu0
  %v2081 = vadd.f32 %v1902, %v2080
  %v2082 = vpop.f32.mrf.mxu0
  %2083 = vmatprep.mubr.f32.mxu0 0.0
  %2084 = vmatmul.mubr.f32.gmra.mxu0 %v1866
  %v2085 = vpop.f32.mrf.mxu0
  %v2086 = vadd.f32 %v1902, %v2085
  %v2087 = vpop.f32.mrf.mxu0
  %2088 = vmatprep.mubr.f32.mxu0 0.0
  %2089 = vmatmul.mubr.f32.gmra.mxu0 %v1867
  %v2090 = vpop.f32.mrf.mxu0
  %v2091 = vadd.f32 %v1902, %v2090
  %v2092 = vpop.f32.mrf.mxu0
  %2093 = vmatprep.mubr.f32.mxu0 0.0
  %2094 = vmatmul.mubr.f32.gmra.mxu0 %v1868
  %v2095 = vpop.f32.mrf.mxu0
  %v2096 = vadd.f32 %v1902, %v2095
  %v2097 = vpop.f32.mrf.mxu0
  %2098 = vmatprep.mubr.f32.mxu0 0.0
  %2099 = vmatmul.mubr.f32.gmra.mxu0 %v1869
  %v2100 = vpop.f32.mrf.mxu0
  %v2101 = vadd.f32 %v1902, %v2100
  %v2102 = vpop.f32.mrf.mxu0
  %2103 = vmatprep.mubr.f32.mxu0 0.0
  %2104 = vmatmul.mubr.f32.gmra.mxu0 %v1870
  %v2105 = vpop.f32.mrf.mxu0
  %v2106 = vadd.f32 %v1902, %v2105
  %v2107 = vpop.f32.mrf.mxu0
  %2108 = vmatprep.mubr.f32.mxu0 0.0
  %2109 = vmatmul.mubr.f32.gmra.mxu0 %v1871
  %v2110 = vpop.f32.mrf.mxu0
  %v2111 = vadd.f32 %v1902, %v2110
  %v2112 = vpop.f32.mrf.mxu0
  %2113 = vmatprep.mubr.f32.mxu0 0.0
  %2114 = vmatmul.mubr.f32.gmra.mxu0 %v1872
  %v2115 = vpop.f32.mrf.mxu0
  %v2116 = vadd.f32 %v1902, %v2115
  %v2117 = vpop.f32.mrf.mxu0
  %2118 = vmatprep.mubr.f32.mxu0 0.0
  %2119 = vmatmul.mubr.f32.gmra.mxu0 %v1873
  %v2120 = vpop.f32.mrf.mxu0
  %v2121 = vadd.f32 %v1902, %v2120
  %v2122 = vpop.f32.mrf.mxu0
  %2123 = vmatprep.mubr.f32.mxu0 0.0
  %2124 = vmatmul.mubr.f32.gmra.mxu0 %v1874
  %v2125 = vpop.f32.mrf.mxu0
  %v2126 = vadd.f32 %v1902, %v2125
  %v2127 = vpop.f32.mrf.mxu0
  %2128 = vmatprep.mubr.f32.mxu0 0.0
  %2129 = vmatmul.mubr.f32.gmra.mxu0 %v1875
  %v2130 = vpop.f32.mrf.mxu0
  %v2131 = vadd.f32 %v1902, %v2130
  %v2132 = vpop.f32.mrf.mxu0
  %2133 = vmatprep.mubr.f32.mxu0 0.0
  %2134 = vmatmul.mubr.f32.gmra.mxu0 %v1876
  %v2135 = vpop.f32.mrf.mxu0
  %v2136 = vadd.f32 %v1902, %v2135
  %v2137 = vpop.f32.mrf.mxu0
  %2138 = vmatprep.mubr.f32.mxu0 0.0
  %2139 = vmatmul.mubr.f32.gmra.mxu0 %v1877
  %v2140 = vpop.f32.mrf.mxu0
  %v2141 = vadd.f32 %v1902, %v2140
  %v2142 = vpop.f32.mrf.mxu0
  %2143 = vmatprep.mubr.f32.mxu0 0.0
  %2144 = vmatmul.mubr.f32.gmra.mxu0 %v1878
  %v2145 = vpop.f32.mrf.mxu0
  %v2146 = vadd.f32 %v1902, %v2145
  %v2147 = vpop.f32.mrf.mxu0
  %2148 = vmatprep.mubr.f32.mxu0 0.0
  %2149 = vmatmul.mubr.f32.gmra.mxu0 %v1879
  %v2150 = vpop.f32.mrf.mxu0
  %v2151 = vadd.f32 %v1902, %v2150
  %v2152 = vpop.f32.mrf.mxu0
  %2153 = vmatprep.mubr.f32.mxu0 0.0
  %2154 = vmatmul.mubr.f32.gmra.mxu0 %v1880
  %v2155 = vpop.f32.mrf.mxu0
  %v2156 = vadd.f32 %v1902, %v2155
  %v2157 = vpop.f32.mrf.mxu0
  %2158 = vdwg.mxu0
  %2159 = vst [vmem:[%s7] sm:$0xff] %v1971
  %2160 = vst [vmem:[%s7 + $0x8] sm:$0xff] %v1976
  %2161 = vst [vmem:[%s7 + $0x10] sm:$0xff] %v1981
  %2162 = vst [vmem:[%s7 + $0x18] sm:$0xff] %v1986
  %2163 = vst [vmem:[%s7 + $0x20] sm:$0xff] %v1991
  %2164 = vst [vmem:[%s7 + $0x28] sm:$0xff] %v1996
  %2165 = vst [vmem:[%s7 + $0x30] sm:$0xff] %v2001
  %2166 = vst [vmem:[%s7 + $0x38] sm:$0xff] %v2006
  %2167 = vst [vmem:[%s7 + $0x40] sm:$0xff] %v2011
  %2168 = vst [vmem:[%s7 + $0x48] sm:$0xff] %v2016
  %2169 = vst [vmem:[%s7 + $0x50] sm:$0xff] %v2021
  %2170 = vst [vmem:[%s7 + $0x58] sm:$0xff] %v2026
  %2171 = vst [vmem:[%s7 + $0x60] sm:$0xff] %v2031
  %2172 = vst [vmem:[%s7 + $0x68] sm:$0xff] %v2036
  %2173 = vst [vmem:[%s7 + $0x70] sm:$0xff] %v2041
  %2174 = vst [vmem:[%s7 + $0x78] sm:$0xff] %v2046
  %2175 = vst [vmem:[%s7 + $0x80] sm:$0xff] %v2051
  %2176 = vst [vmem:[%s7 + $0x88] sm:$0xff] %v2056
  %2177 = vst [vmem:[%s7 + $0x90] sm:$0xff] %v2061
  %2178 = vst [vmem:[%s7 + $0x98] sm:$0xff] %v2066
  %2179 = vst [vmem:[%s7 + $0xa0] sm:$0xff] %v2071
  %2180 = vst [vmem:[%s7 + $0xa8] sm:$0xff] %v2076
  %2181 = vst [vmem:[%s7 + $0xb0] sm:$0xff] %v2081
  %2182 = vst [vmem:[%s7 + $0xb8] sm:$0xff] %v2086
  %2183 = vst [vmem:[%s7 + $0xc0] sm:$0xff] %v2091
  %2184 = vst [vmem:[%s7 + $0xc8] sm:$0xff] %v2096
  %2185 = vst [vmem:[%s7 + $0xd0] sm:$0xff] %v2101
  %2186 = vst [vmem:[%s7 + $0xd8] sm:$0xff] %v2106
  %2187 = vst [vmem:[%s7 + $0xe0] sm:$0xff] %v2111
  %2188 = vst [vmem:[%s7 + $0xe8] sm:$0xff] %v2116
  %2189 = vst [vmem:[%s7 + $0xf0] sm:$0xff] %v2121
  %2190 = vst [vmem:[%s7 + $0xf8] sm:$0xff] %v2126
  %2191 = vst [vmem:[%s7 + $0x100] sm:$0xff] %v2131
  %2192 = vst [vmem:[%s7 + $0x108] sm:$0xff] %v2136
  %2193 = vst [vmem:[%s7 + $0x110] sm:$0xff] %v2141
  %2194 = vst [vmem:[%s7 + $0x118] sm:$0xff] %v2146
  %2195 = vst [vmem:[%s7 + $0x120] sm:$0xff] %v2151
  %2196 = vst [vmem:[%s7 + $0x128] sm:$0xff] %v2156
  // Predicated region
  $region30: #{plane_net_forward.1} parent=0 // pred_check
    _
  $region31: #{plane_net_forward.1} parent=0 // pred_check_branch
    %2198 = sbr.rel (0) target = $region33
  $region32: #{plane_net_forward.1} parent=0 // pred_region
    _
  $region33: #{plane_net_forward.1} parent=0 // pred_fallthru
    _
  // Predicated region
  $region34: #{plane_net_forward.1} parent=0 // pred_check
    _
  $region35: #{plane_net_forward.1} parent=0 // pred_check_branch
    %2200 = sbr.rel (0) target = $region37
  $region36: #{plane_net_forward.1} parent=0 // pred_region
    _
  $region37: #{plane_net_forward.1} parent=0 // pred_fallthru
    _

</llo_original>
